<compile_context>
chip_gen: v7x
topology: tpu7x:2x2x1
jax: 0.10.0
libtpu: 0.0.40
codegen_flags: <defaults>
</compile_context>

<pallas_src>
import jax
import jax.numpy as jnp
from jax import lax
from jax.experimental import pallas as pl
from jax.experimental.pallas import tpu as pltpu

EPS = 1e-3
KH = KW = 5
PAD = 2
CB = 128  # channel block size (lane-dense)


# ---------------------------------------------------------------------------
# Fused kernel: 1x1 conv + BN + ReLU + padded 5x5 depthwise conv + BN + ReLU
# Grid: (Cout_padded // CB,) over output-channel blocks.
# ---------------------------------------------------------------------------
def _fused_kernel(x_ref, w1_ref, g1_ref, b1_ref, wt_ref, g2_ref, b2_ref,
                  o_ref, xp_ref):
    H, W, Cb = o_ref.shape

    # ---- stage 1: 1x1 conv (matmul on MXU) + BN(train) + ReLU ---------------
    y = jnp.dot(x_ref[...], w1_ref[...],
                preferred_element_type=jnp.float32)                 # (HW, Cb)
    mean1 = jnp.mean(y, axis=0, keepdims=True)
    var1 = jnp.mean(jnp.square(y - mean1), axis=0, keepdims=True)    # biased
    y = jnp.maximum(
        (y - mean1) * lax.rsqrt(var1 + EPS) * g1_ref[...] + b1_ref[...], 0.0)

    # ---- spatial zero-padding inside the kernel (VMEM scratch) --------------
    xp_ref[...] = jnp.zeros_like(xp_ref)
    for h in range(H):                          # write interior row by row
        xp_ref[PAD + h, PAD:PAD + W, :] = y[h * W:(h + 1) * W, :]

    # ---- stage 2: 5x5 depthwise conv (25-tap VPU MAC) + BN(train) + ReLU ----
    wts = wt_ref[...]                           # (25, Cb), loaded once
    acc = jnp.zeros((H, W, Cb), dtype=jnp.float32)
    for j in range(KW):                         # j outer: 5 sublane-shifted slabs
        slab = xp_ref[:, j:j + W, :]            # (H + 2*PAD, W, Cb)
        for i in range(KH):                     # i shift: free leading-dim offset
            k = i * KW + j
            acc = acc + slab[i:i + H] * wts[k:k + 1, :]
    mean2 = jnp.mean(acc, axis=(0, 1), keepdims=True)
    var2 = jnp.mean(jnp.square(acc - mean2), axis=(0, 1), keepdims=True)
    g2 = g2_ref[...].reshape(1, 1, Cb)
    b2 = b2_ref[...].reshape(1, 1, Cb)
    o_ref[...] = jnp.maximum(
        (acc - mean2) * lax.rsqrt(var2 + EPS) * g2 + b2, 0.0)


def _fused_call(x2d, w1p, g1p, b1p, wtp, g2p, b2p, H, W):
    HW, Cin = x2d.shape
    Cpad = w1p.shape[1]
    nblk = Cpad // CB
    return pl.pallas_call(
        _fused_kernel,
        out_shape=jax.ShapeDtypeStruct((H, W, Cpad), jnp.float32),
        grid_spec=pltpu.PrefetchScalarGridSpec(
            num_scalar_prefetch=0,
            grid=(nblk,),
            in_specs=[
                pl.BlockSpec((HW, Cin), lambda c: (0, 0)),        # x (resident)
                pl.BlockSpec((Cin, CB), lambda c: (0, c)),        # w1 block
                pl.BlockSpec((1, CB), lambda c: (0, c)),          # gamma1
                pl.BlockSpec((1, CB), lambda c: (0, c)),          # beta1
                pl.BlockSpec((KH * KW, CB), lambda c: (0, c)),    # 25 dw taps
                pl.BlockSpec((1, CB), lambda c: (0, c)),          # gamma2
                pl.BlockSpec((1, CB), lambda c: (0, c)),          # beta2
            ],
            out_specs=pl.BlockSpec((H, W, CB), lambda c: (0, 0, c)),
            scratch_shapes=[
                pltpu.VMEM((H + 2 * PAD, W + 2 * PAD, CB), jnp.float32)],
        ),
        compiler_params=pltpu.CompilerParams(
            dimension_semantics=("parallel",)),
    )(x2d, w1p, g1p, b1p, wtp, g2p, b2p)


# ---------------------------------------------------------------------------
# Module forward (NCHW in / NCHW out)
# ---------------------------------------------------------------------------
def forward(x_nchw, params):
    w1, g1, b1, wdw, g2, b2 = params
    N, Cin, H, W = x_nchw.shape
    Cout = w1.shape[1]
    assert N == 1, "BN stats are reduced over HW only (valid since batch=1)"

    # Pad Cout to a multiple of 128 for lane-dense tiles; padded channels are
    # all-zero and are sliced off before returning.
    Cpad = ((Cout + CB - 1) // CB) * CB
    pad = Cpad - Cout
    w1p = jnp.pad(w1, ((0, 0), (0, pad)))
    wtp = jnp.pad(wdw.reshape(KH * KW, Cout), ((0, 0), (0, pad)))
    g1p = jnp.pad(g1, (0, pad)).reshape(1, Cpad)
    b1p = jnp.pad(b1, (0, pad)).reshape(1, Cpad)
    g2p = jnp.pad(g2, (0, pad)).reshape(1, Cpad)
    b2p = jnp.pad(b2, (0, pad)).reshape(1, Cpad)

    x2d = jnp.transpose(x_nchw, (0, 2, 3, 1)).reshape(N * H * W, Cin)
    y = _fused_call(x2d, w1p, g1p, b1p, wtp, g2p, b2p, H, W)   # (H, W, Cpad)
    y = y[:, :, :Cout]
    return jnp.transpose(y, (2, 0, 1))[None]                   # (1, Cout, H, W)


# ---------------------------------------------------------------------------
# Pure-JAX reference (for correctness check)
# ---------------------------------------------------------------------------
def reference(x_nchw, params):
    w1, g1, b1, wdw, g2, b2 = params

    def bn(y, g, b):
        mean = jnp.mean(y, axis=(0, 2, 3), keepdims=True)
        var = jnp.mean(jnp.square(y - mean), axis=(0, 2, 3), keepdims=True)
        return (y - mean) * lax.rsqrt(var + EPS) * g.reshape(1, -1, 1, 1) \
            + b.reshape(1, -1, 1, 1)

    y = jnp.einsum('nchw,co->nohw', x_nchw, w1)
    y = jnp.maximum(bn(y, g1, b1), 0.0)
    w_oihw = jnp.transpose(wdw, (2, 0, 1))[:, None, :, :]        # (C,1,5,5)
    z = lax.conv_general_dilated(
        y, w_oihw, window_strides=(1, 1), padding=((PAD, PAD), (PAD, PAD)),
        feature_group_count=w_oihw.shape[0],
        dimension_numbers=('NCHW', 'OIHW', 'NCHW'))
    return jnp.maximum(bn(z, g2, b2), 0.0)


if __name__ == "__main__":
    key = jax.random.PRNGKey(0)
    kx, k1, k2, k3, k4, k5, k6 = jax.random.split(key, 7)

    Cin, Cout, H, W = 184, 1104, 7, 7
    x = jax.random.normal(kx, (1, Cin, H, W), dtype=jnp.float32)

    w1 = 0.05 * jax.random.normal(k1, (Cin, Cout), dtype=jnp.float32)     # 1x1 conv weight (Cin,Cout)
    g1 = 1.0 + 0.1 * jax.random.normal(k2, (Cout,), dtype=jnp.float32)    # BN52 gamma
    b1 = 0.1 * jax.random.normal(k3, (Cout,), dtype=jnp.float32)          # BN52 beta
    wdw = 0.1 * jax.random.normal(k4, (KH, KW, Cout), dtype=jnp.float32)  # depthwise weight (5,5,C)
    g2 = 1.0 + 0.1 * jax.random.normal(k5, (Cout,), dtype=jnp.float32)    # BN53 gamma
    b2 = 0.1 * jax.random.normal(k6, (Cout,), dtype=jnp.float32)          # BN53 beta
    params = (w1, g1, b1, wdw, g2, b2)

    fwd = jax.jit(forward)
    out = jax.block_until_ready(fwd(x, params))
    ref = jax.block_until_ready(reference(x, params))

    assert out.shape == (1, Cout, H, W), out.shape
    assert jnp.allclose(out, ref, rtol=2e-3, atol=2e-3), \
        float(jnp.max(jnp.abs(out - ref)))
    print("KERNEL_OK")
</pallas_src>

<mosaic_0001>
module attributes {stable_mosaic.version = 11 : i64} {
  func.func @_fused_kernel(%arg0: i32, %arg1: memref<49x184xf32, #tpu.memory_space<vmem>>, %arg2: memref<184x128xf32, #tpu.memory_space<vmem>>, %arg3: memref<1x128xf32, #tpu.memory_space<vmem>>, %arg4: memref<1x128xf32, #tpu.memory_space<vmem>>, %arg5: memref<25x128xf32, #tpu.memory_space<vmem>>, %arg6: memref<1x128xf32, #tpu.memory_space<vmem>>, %arg7: memref<1x128xf32, #tpu.memory_space<vmem>>, %arg8: memref<7x7x128xf32, #tpu.memory_space<vmem>>, %arg9: memref<11x11x128xf32, #tpu.memory_space<vmem>>) attributes {dimension_semantics = [#tpu.dimension_semantics<parallel>], iteration_bounds = array<i64: 9>, scalar_prefetch = 0 : i64, scratch_operands = 1 : i64, tpu.core_type = #tpu.core_type<tc>, window_params = [{pipeline_mode = #tpu.pipeline_mode<synchronous>, transform_indices = @transform_0, window_bounds = array<i64: 49, 184>}, {transform_indices = @transform_1, window_bounds = array<i64: 184, 128>}, {transform_indices = @transform_2, window_bounds = array<i64: 1, 128>}, {transform_indices = @transform_3, window_bounds = array<i64: 1, 128>}, {transform_indices = @transform_4, window_bounds = array<i64: 25, 128>}, {transform_indices = @transform_5, window_bounds = array<i64: 1, 128>}, {transform_indices = @transform_6, window_bounds = array<i64: 1, 128>}, {transform_indices = @transform_7, window_bounds = array<i64: 7, 7, 128>}]} {
    %c0 = arith.constant 0 : index
    %c0_0 = arith.constant 0 : index
    %0 = vector.load %arg1[%c0, %c0_0] : memref<49x184xf32, #tpu.memory_space<vmem>>, vector<49x184xf32>
    %c0_1 = arith.constant 0 : index
    %c0_2 = arith.constant 0 : index
    %1 = vector.load %arg2[%c0_1, %c0_2] : memref<184x128xf32, #tpu.memory_space<vmem>>, vector<184x128xf32>
    %cst = arith.constant dense<0.000000e+00> : vector<49x128xf32>
    %2 = tpu.matmul %0, %1, %cst {dimension_numbers = #tpu.dot_dimension_numbers<[1], [0], [0], [1], [0, 0, 1, 1], [], []>} : vector<49x184xf32>, vector<184x128xf32>, vector<49x128xf32> -> vector<49x128xf32>
    %cst_3 = arith.constant dense<0.000000e+00> : vector<128xf32>
    %3 = vector.multi_reduction <add>, %2, %cst_3 [0] : vector<49x128xf32> to vector<128xf32>
    %4 = vector.shape_cast %3 : vector<128xf32> to vector<1x128xf32>
    %cst_4 = arith.constant 4.900000e+01 : f32
    %5 = vector.broadcast %cst_4 : f32 to vector<1x128xf32>
    %6 = arith.divf %4, %5 : vector<1x128xf32>
    %7 = vector.broadcast %6 : vector<1x128xf32> to vector<49x128xf32>
    %8 = arith.subf %2, %7 : vector<49x128xf32>
    %9 = arith.mulf %8, %8 : vector<49x128xf32>
    %cst_5 = arith.constant dense<0.000000e+00> : vector<128xf32>
    %10 = vector.multi_reduction <add>, %9, %cst_5 [0] : vector<49x128xf32> to vector<128xf32>
    %11 = vector.shape_cast %10 : vector<128xf32> to vector<1x128xf32>
    %cst_6 = arith.constant 4.900000e+01 : f32
    %12 = vector.broadcast %cst_6 : f32 to vector<1x128xf32>
    %13 = arith.divf %11, %12 : vector<1x128xf32>
    %14 = vector.broadcast %6 : vector<1x128xf32> to vector<49x128xf32>
    %15 = arith.subf %2, %14 : vector<49x128xf32>
    %cst_7 = arith.constant 1.000000e-03 : f32
    %16 = vector.broadcast %cst_7 : f32 to vector<1x128xf32>
    %17 = arith.addf %13, %16 : vector<1x128xf32>
    %18 = math.rsqrt %17 : vector<1x128xf32>
    %19 = vector.broadcast %18 : vector<1x128xf32> to vector<49x128xf32>
    %20 = arith.mulf %15, %19 : vector<49x128xf32>
    %c0_8 = arith.constant 0 : index
    %c0_9 = arith.constant 0 : index
    %21 = vector.load %arg3[%c0_8, %c0_9] : memref<1x128xf32, #tpu.memory_space<vmem>>, vector<1x128xf32>
    %22 = vector.broadcast %21 : vector<1x128xf32> to vector<49x128xf32>
    %23 = arith.mulf %20, %22 : vector<49x128xf32>
    %c0_10 = arith.constant 0 : index
    %c0_11 = arith.constant 0 : index
    %24 = vector.load %arg4[%c0_10, %c0_11] : memref<1x128xf32, #tpu.memory_space<vmem>>, vector<1x128xf32>
    %25 = vector.broadcast %24 : vector<1x128xf32> to vector<49x128xf32>
    %26 = arith.addf %23, %25 : vector<49x128xf32>
    %cst_12 = arith.constant 0.000000e+00 : f32
    %27 = vector.broadcast %cst_12 : f32 to vector<49x128xf32>
    %28 = arith.maximumf %26, %27 : vector<49x128xf32>
    %cst_13 = arith.constant 0.000000e+00 : f32
    %29 = vector.broadcast %cst_13 : f32 to vector<11x11x128xf32>
    %c0_14 = arith.constant 0 : index
    %c0_15 = arith.constant 0 : index
    %c0_16 = arith.constant 0 : index
    %30 = vector.load %arg9[%c0_14, %c0_15, %c0_16] : memref<11x11x128xf32, #tpu.memory_space<vmem>>, vector<11x11x128xf32>
    tpu.vector_store %arg9[%c0_14, %c0_15, %c0_16], %29 {strides = array<i32>} : memref<11x11x128xf32, #tpu.memory_space<vmem>>, vector<11x11x128xf32>,
    %31 = vector.extract_strided_slice %28 {offsets = [0, 0], sizes = [7, 128], strides = [1, 1]} : vector<49x128xf32> to vector<7x128xf32>
    %c2 = arith.constant 2 : index
    %c2_17 = arith.constant 2 : index
    %c0_18 = arith.constant 0 : index
    %32 = vector.load %arg9[%c2, %c2_17, %c0_18] : memref<11x11x128xf32, #tpu.memory_space<vmem>>, vector<1x7x128xf32>
    %33 = vector.shape_cast %32 : vector<1x7x128xf32> to vector<7x128xf32>
    %34 = vector.shape_cast %31 : vector<7x128xf32> to vector<1x7x128xf32>
    tpu.vector_store %arg9[%c2, %c2_17, %c0_18], %34 {strides = array<i32>} : memref<11x11x128xf32, #tpu.memory_space<vmem>>, vector<1x7x128xf32>,
    %35 = vector.extract_strided_slice %28 {offsets = [7, 0], sizes = [7, 128], strides = [1, 1]} : vector<49x128xf32> to vector<7x128xf32>
    %c3 = arith.constant 3 : index
    %c2_19 = arith.constant 2 : index
    %c0_20 = arith.constant 0 : index
    %36 = vector.load %arg9[%c3, %c2_19, %c0_20] : memref<11x11x128xf32, #tpu.memory_space<vmem>>, vector<1x7x128xf32>
    %37 = vector.shape_cast %36 : vector<1x7x128xf32> to vector<7x128xf32>
    %38 = vector.shape_cast %35 : vector<7x128xf32> to vector<1x7x128xf32>
    tpu.vector_store %arg9[%c3, %c2_19, %c0_20], %38 {strides = array<i32>} : memref<11x11x128xf32, #tpu.memory_space<vmem>>, vector<1x7x128xf32>,
    %39 = vector.extract_strided_slice %28 {offsets = [14, 0], sizes = [7, 128], strides = [1, 1]} : vector<49x128xf32> to vector<7x128xf32>
    %c4 = arith.constant 4 : index
    %c2_21 = arith.constant 2 : index
    %c0_22 = arith.constant 0 : index
    %40 = vector.load %arg9[%c4, %c2_21, %c0_22] : memref<11x11x128xf32, #tpu.memory_space<vmem>>, vector<1x7x128xf32>
    %41 = vector.shape_cast %40 : vector<1x7x128xf32> to vector<7x128xf32>
    %42 = vector.shape_cast %39 : vector<7x128xf32> to vector<1x7x128xf32>
    tpu.vector_store %arg9[%c4, %c2_21, %c0_22], %42 {strides = array<i32>} : memref<11x11x128xf32, #tpu.memory_space<vmem>>, vector<1x7x128xf32>,
    %43 = vector.extract_strided_slice %28 {offsets = [21, 0], sizes = [7, 128], strides = [1, 1]} : vector<49x128xf32> to vector<7x128xf32>
    %c5 = arith.constant 5 : index
    %c2_23 = arith.constant 2 : index
    %c0_24 = arith.constant 0 : index
    %44 = vector.load %arg9[%c5, %c2_23, %c0_24] : memref<11x11x128xf32, #tpu.memory_space<vmem>>, vector<1x7x128xf32>
    %45 = vector.shape_cast %44 : vector<1x7x128xf32> to vector<7x128xf32>
    %46 = vector.shape_cast %43 : vector<7x128xf32> to vector<1x7x128xf32>
    tpu.vector_store %arg9[%c5, %c2_23, %c0_24], %46 {strides = array<i32>} : memref<11x11x128xf32, #tpu.memory_space<vmem>>, vector<1x7x128xf32>,
    %47 = vector.extract_strided_slice %28 {offsets = [28, 0], sizes = [7, 128], strides = [1, 1]} : vector<49x128xf32> to vector<7x128xf32>
    %c6 = arith.constant 6 : index
    %c2_25 = arith.constant 2 : index
    %c0_26 = arith.constant 0 : index
    %48 = vector.load %arg9[%c6, %c2_25, %c0_26] : memref<11x11x128xf32, #tpu.memory_space<vmem>>, vector<1x7x128xf32>
    %49 = vector.shape_cast %48 : vector<1x7x128xf32> to vector<7x128xf32>
    %50 = vector.shape_cast %47 : vector<7x128xf32> to vector<1x7x128xf32>
    tpu.vector_store %arg9[%c6, %c2_25, %c0_26], %50 {strides = array<i32>} : memref<11x11x128xf32, #tpu.memory_space<vmem>>, vector<1x7x128xf32>,
    %51 = vector.extract_strided_slice %28 {offsets = [35, 0], sizes = [7, 128], strides = [1, 1]} : vector<49x128xf32> to vector<7x128xf32>
    %c7 = arith.constant 7 : index
    %c2_27 = arith.constant 2 : index
    %c0_28 = arith.constant 0 : index
    %52 = vector.load %arg9[%c7, %c2_27, %c0_28] : memref<11x11x128xf32, #tpu.memory_space<vmem>>, vector<1x7x128xf32>
    %53 = vector.shape_cast %52 : vector<1x7x128xf32> to vector<7x128xf32>
    %54 = vector.shape_cast %51 : vector<7x128xf32> to vector<1x7x128xf32>
    tpu.vector_store %arg9[%c7, %c2_27, %c0_28], %54 {strides = array<i32>} : memref<11x11x128xf32, #tpu.memory_space<vmem>>, vector<1x7x128xf32>,
    %55 = vector.extract_strided_slice %28 {offsets = [42, 0], sizes = [7, 128], strides = [1, 1]} : vector<49x128xf32> to vector<7x128xf32>
    %c8 = arith.constant 8 : index
    %c2_29 = arith.constant 2 : index
    %c0_30 = arith.constant 0 : index
    %56 = vector.load %arg9[%c8, %c2_29, %c0_30] : memref<11x11x128xf32, #tpu.memory_space<vmem>>, vector<1x7x128xf32>
    %57 = vector.shape_cast %56 : vector<1x7x128xf32> to vector<7x128xf32>
    %58 = vector.shape_cast %55 : vector<7x128xf32> to vector<1x7x128xf32>
    tpu.vector_store %arg9[%c8, %c2_29, %c0_30], %58 {strides = array<i32>} : memref<11x11x128xf32, #tpu.memory_space<vmem>>, vector<1x7x128xf32>,
    %c0_31 = arith.constant 0 : index
    %c0_32 = arith.constant 0 : index
    %59 = vector.load %arg5[%c0_31, %c0_32] : memref<25x128xf32, #tpu.memory_space<vmem>>, vector<25x128xf32>
    %cst_33 = arith.constant 0.000000e+00 : f32
    %60 = vector.broadcast %cst_33 : f32 to vector<7x7x128xf32>
    %c0_34 = arith.constant 0 : index
    %c0_35 = arith.constant 0 : index
    %c0_36 = arith.constant 0 : index
    %61 = vector.load %arg9[%c0_34, %c0_35, %c0_36] : memref<11x11x128xf32, #tpu.memory_space<vmem>>, vector<11x7x128xf32>
    %62 = vector.extract_strided_slice %61 {offsets = [0, 0, 0], sizes = [7, 7, 128], strides = [1, 1, 1]} : vector<11x7x128xf32> to vector<7x7x128xf32>
    %63 = vector.extract_strided_slice %59 {offsets = [0, 0], sizes = [1, 128], strides = [1, 1]} : vector<25x128xf32> to vector<1x128xf32>
    %64 = vector.shape_cast %63 : vector<1x128xf32> to vector<1x1x128xf32>
    %65 = vector.broadcast %64 : vector<1x1x128xf32> to vector<7x7x128xf32>
    %66 = arith.mulf %62, %65 : vector<7x7x128xf32>
    %67 = arith.addf %60, %66 : vector<7x7x128xf32>
    %68 = vector.extract_strided_slice %61 {offsets = [1, 0, 0], sizes = [7, 7, 128], strides = [1, 1, 1]} : vector<11x7x128xf32> to vector<7x7x128xf32>
    %69 = vector.extract_strided_slice %59 {offsets = [5, 0], sizes = [1, 128], strides = [1, 1]} : vector<25x128xf32> to vector<1x128xf32>
    %70 = vector.shape_cast %69 : vector<1x128xf32> to vector<1x1x128xf32>
    %71 = vector.broadcast %70 : vector<1x1x128xf32> to vector<7x7x128xf32>
    %72 = arith.mulf %68, %71 : vector<7x7x128xf32>
    %73 = arith.addf %67, %72 : vector<7x7x128xf32>
    %74 = vector.extract_strided_slice %61 {offsets = [2, 0, 0], sizes = [7, 7, 128], strides = [1, 1, 1]} : vector<11x7x128xf32> to vector<7x7x128xf32>
    %75 = vector.extract_strided_slice %59 {offsets = [10, 0], sizes = [1, 128], strides = [1, 1]} : vector<25x128xf32> to vector<1x128xf32>
    %76 = vector.shape_cast %75 : vector<1x128xf32> to vector<1x1x128xf32>
    %77 = vector.broadcast %76 : vector<1x1x128xf32> to vector<7x7x128xf32>
    %78 = arith.mulf %74, %77 : vector<7x7x128xf32>
    %79 = arith.addf %73, %78 : vector<7x7x128xf32>
    %80 = vector.extract_strided_slice %61 {offsets = [3, 0, 0], sizes = [7, 7, 128], strides = [1, 1, 1]} : vector<11x7x128xf32> to vector<7x7x128xf32>
    %81 = vector.extract_strided_slice %59 {offsets = [15, 0], sizes = [1, 128], strides = [1, 1]} : vector<25x128xf32> to vector<1x128xf32>
    %82 = vector.shape_cast %81 : vector<1x128xf32> to vector<1x1x128xf32>
    %83 = vector.broadcast %82 : vector<1x1x128xf32> to vector<7x7x128xf32>
    %84 = arith.mulf %80, %83 : vector<7x7x128xf32>
    %85 = arith.addf %79, %84 : vector<7x7x128xf32>
    %86 = vector.extract_strided_slice %61 {offsets = [4, 0, 0], sizes = [7, 7, 128], strides = [1, 1, 1]} : vector<11x7x128xf32> to vector<7x7x128xf32>
    %87 = vector.extract_strided_slice %59 {offsets = [20, 0], sizes = [1, 128], strides = [1, 1]} : vector<25x128xf32> to vector<1x128xf32>
    %88 = vector.shape_cast %87 : vector<1x128xf32> to vector<1x1x128xf32>
    %89 = vector.broadcast %88 : vector<1x1x128xf32> to vector<7x7x128xf32>
    %90 = arith.mulf %86, %89 : vector<7x7x128xf32>
    %91 = arith.addf %85, %90 : vector<7x7x128xf32>
    %c0_37 = arith.constant 0 : index
    %c1 = arith.constant 1 : index
    %c0_38 = arith.constant 0 : index
    %92 = vector.load %arg9[%c0_37, %c1, %c0_38] : memref<11x11x128xf32, #tpu.memory_space<vmem>>, vector<11x7x128xf32>
    %93 = vector.extract_strided_slice %92 {offsets = [0, 0, 0], sizes = [7, 7, 128], strides = [1, 1, 1]} : vector<11x7x128xf32> to vector<7x7x128xf32>
    %94 = vector.extract_strided_slice %59 {offsets = [1, 0], sizes = [1, 128], strides = [1, 1]} : vector<25x128xf32> to vector<1x128xf32>
    %95 = vector.shape_cast %94 : vector<1x128xf32> to vector<1x1x128xf32>
    %96 = vector.broadcast %95 : vector<1x1x128xf32> to vector<7x7x128xf32>
    %97 = arith.mulf %93, %96 : vector<7x7x128xf32>
    %98 = arith.addf %91, %97 : vector<7x7x128xf32>
    %99 = vector.extract_strided_slice %92 {offsets = [1, 0, 0], sizes = [7, 7, 128], strides = [1, 1, 1]} : vector<11x7x128xf32> to vector<7x7x128xf32>
    %100 = vector.extract_strided_slice %59 {offsets = [6, 0], sizes = [1, 128], strides = [1, 1]} : vector<25x128xf32> to vector<1x128xf32>
    %101 = vector.shape_cast %100 : vector<1x128xf32> to vector<1x1x128xf32>
    %102 = vector.broadcast %101 : vector<1x1x128xf32> to vector<7x7x128xf32>
    %103 = arith.mulf %99, %102 : vector<7x7x128xf32>
    %104 = arith.addf %98, %103 : vector<7x7x128xf32>
    %105 = vector.extract_strided_slice %92 {offsets = [2, 0, 0], sizes = [7, 7, 128], strides = [1, 1, 1]} : vector<11x7x128xf32> to vector<7x7x128xf32>
    %106 = vector.extract_strided_slice %59 {offsets = [11, 0], sizes = [1, 128], strides = [1, 1]} : vector<25x128xf32> to vector<1x128xf32>
    %107 = vector.shape_cast %106 : vector<1x128xf32> to vector<1x1x128xf32>
    %108 = vector.broadcast %107 : vector<1x1x128xf32> to vector<7x7x128xf32>
    %109 = arith.mulf %105, %108 : vector<7x7x128xf32>
    %110 = arith.addf %104, %109 : vector<7x7x128xf32>
    %111 = vector.extract_strided_slice %92 {offsets = [3, 0, 0], sizes = [7, 7, 128], strides = [1, 1, 1]} : vector<11x7x128xf32> to vector<7x7x128xf32>
    %112 = vector.extract_strided_slice %59 {offsets = [16, 0], sizes = [1, 128], strides = [1, 1]} : vector<25x128xf32> to vector<1x128xf32>
    %113 = vector.shape_cast %112 : vector<1x128xf32> to vector<1x1x128xf32>
    %114 = vector.broadcast %113 : vector<1x1x128xf32> to vector<7x7x128xf32>
    %115 = arith.mulf %111, %114 : vector<7x7x128xf32>
    %116 = arith.addf %110, %115 : vector<7x7x128xf32>
    %117 = vector.extract_strided_slice %92 {offsets = [4, 0, 0], sizes = [7, 7, 128], strides = [1, 1, 1]} : vector<11x7x128xf32> to vector<7x7x128xf32>
    %118 = vector.extract_strided_slice %59 {offsets = [21, 0], sizes = [1, 128], strides = [1, 1]} : vector<25x128xf32> to vector<1x128xf32>
    %119 = vector.shape_cast %118 : vector<1x128xf32> to vector<1x1x128xf32>
    %120 = vector.broadcast %119 : vector<1x1x128xf32> to vector<7x7x128xf32>
    %121 = arith.mulf %117, %120 : vector<7x7x128xf32>
    %122 = arith.addf %116, %121 : vector<7x7x128xf32>
    %c0_39 = arith.constant 0 : index
    %c2_40 = arith.constant 2 : index
    %c0_41 = arith.constant 0 : index
    %123 = vector.load %arg9[%c0_39, %c2_40, %c0_41] : memref<11x11x128xf32, #tpu.memory_space<vmem>>, vector<11x7x128xf32>
    %124 = vector.extract_strided_slice %123 {offsets = [0, 0, 0], sizes = [7, 7, 128], strides = [1, 1, 1]} : vector<11x7x128xf32> to vector<7x7x128xf32>
    %125 = vector.extract_strided_slice %59 {offsets = [2, 0], sizes = [1, 128], strides = [1, 1]} : vector<25x128xf32> to vector<1x128xf32>
    %126 = vector.shape_cast %125 : vector<1x128xf32> to vector<1x1x128xf32>
    %127 = vector.broadcast %126 : vector<1x1x128xf32> to vector<7x7x128xf32>
    %128 = arith.mulf %124, %127 : vector<7x7x128xf32>
    %129 = arith.addf %122, %128 : vector<7x7x128xf32>
    %130 = vector.extract_strided_slice %123 {offsets = [1, 0, 0], sizes = [7, 7, 128], strides = [1, 1, 1]} : vector<11x7x128xf32> to vector<7x7x128xf32>
    %131 = vector.extract_strided_slice %59 {offsets = [7, 0], sizes = [1, 128], strides = [1, 1]} : vector<25x128xf32> to vector<1x128xf32>
    %132 = vector.shape_cast %131 : vector<1x128xf32> to vector<1x1x128xf32>
    %133 = vector.broadcast %132 : vector<1x1x128xf32> to vector<7x7x128xf32>
    %134 = arith.mulf %130, %133 : vector<7x7x128xf32>
    %135 = arith.addf %129, %134 : vector<7x7x128xf32>
    %136 = vector.extract_strided_slice %123 {offsets = [2, 0, 0], sizes = [7, 7, 128], strides = [1, 1, 1]} : vector<11x7x128xf32> to vector<7x7x128xf32>
    %137 = vector.extract_strided_slice %59 {offsets = [12, 0], sizes = [1, 128], strides = [1, 1]} : vector<25x128xf32> to vector<1x128xf32>
    %138 = vector.shape_cast %137 : vector<1x128xf32> to vector<1x1x128xf32>
    %139 = vector.broadcast %138 : vector<1x1x128xf32> to vector<7x7x128xf32>
    %140 = arith.mulf %136, %139 : vector<7x7x128xf32>
    %141 = arith.addf %135, %140 : vector<7x7x128xf32>
    %142 = vector.extract_strided_slice %123 {offsets = [3, 0, 0], sizes = [7, 7, 128], strides = [1, 1, 1]} : vector<11x7x128xf32> to vector<7x7x128xf32>
    %143 = vector.extract_strided_slice %59 {offsets = [17, 0], sizes = [1, 128], strides = [1, 1]} : vector<25x128xf32> to vector<1x128xf32>
    %144 = vector.shape_cast %143 : vector<1x128xf32> to vector<1x1x128xf32>
    %145 = vector.broadcast %144 : vector<1x1x128xf32> to vector<7x7x128xf32>
    %146 = arith.mulf %142, %145 : vector<7x7x128xf32>
    %147 = arith.addf %141, %146 : vector<7x7x128xf32>
    %148 = vector.extract_strided_slice %123 {offsets = [4, 0, 0], sizes = [7, 7, 128], strides = [1, 1, 1]} : vector<11x7x128xf32> to vector<7x7x128xf32>
    %149 = vector.extract_strided_slice %59 {offsets = [22, 0], sizes = [1, 128], strides = [1, 1]} : vector<25x128xf32> to vector<1x128xf32>
    %150 = vector.shape_cast %149 : vector<1x128xf32> to vector<1x1x128xf32>
    %151 = vector.broadcast %150 : vector<1x1x128xf32> to vector<7x7x128xf32>
    %152 = arith.mulf %148, %151 : vector<7x7x128xf32>
    %153 = arith.addf %147, %152 : vector<7x7x128xf32>
    %c0_42 = arith.constant 0 : index
    %c3_43 = arith.constant 3 : index
    %c0_44 = arith.constant 0 : index
    %154 = vector.load %arg9[%c0_42, %c3_43, %c0_44] : memref<11x11x128xf32, #tpu.memory_space<vmem>>, vector<11x7x128xf32>
    %155 = vector.extract_strided_slice %154 {offsets = [0, 0, 0], sizes = [7, 7, 128], strides = [1, 1, 1]} : vector<11x7x128xf32> to vector<7x7x128xf32>
    %156 = vector.extract_strided_slice %59 {offsets = [3, 0], sizes = [1, 128], strides = [1, 1]} : vector<25x128xf32> to vector<1x128xf32>
    %157 = vector.shape_cast %156 : vector<1x128xf32> to vector<1x1x128xf32>
    %158 = vector.broadcast %157 : vector<1x1x128xf32> to vector<7x7x128xf32>
    %159 = arith.mulf %155, %158 : vector<7x7x128xf32>
    %160 = arith.addf %153, %159 : vector<7x7x128xf32>
    %161 = vector.extract_strided_slice %154 {offsets = [1, 0, 0], sizes = [7, 7, 128], strides = [1, 1, 1]} : vector<11x7x128xf32> to vector<7x7x128xf32>
    %162 = vector.extract_strided_slice %59 {offsets = [8, 0], sizes = [1, 128], strides = [1, 1]} : vector<25x128xf32> to vector<1x128xf32>
    %163 = vector.shape_cast %162 : vector<1x128xf32> to vector<1x1x128xf32>
    %164 = vector.broadcast %163 : vector<1x1x128xf32> to vector<7x7x128xf32>
    %165 = arith.mulf %161, %164 : vector<7x7x128xf32>
    %166 = arith.addf %160, %165 : vector<7x7x128xf32>
    %167 = vector.extract_strided_slice %154 {offsets = [2, 0, 0], sizes = [7, 7, 128], strides = [1, 1, 1]} : vector<11x7x128xf32> to vector<7x7x128xf32>
    %168 = vector.extract_strided_slice %59 {offsets = [13, 0], sizes = [1, 128], strides = [1, 1]} : vector<25x128xf32> to vector<1x128xf32>
    %169 = vector.shape_cast %168 : vector<1x128xf32> to vector<1x1x128xf32>
    %170 = vector.broadcast %169 : vector<1x1x128xf32> to vector<7x7x128xf32>
    %171 = arith.mulf %167, %170 : vector<7x7x128xf32>
    %172 = arith.addf %166, %171 : vector<7x7x128xf32>
    %173 = vector.extract_strided_slice %154 {offsets = [3, 0, 0], sizes = [7, 7, 128], strides = [1, 1, 1]} : vector<11x7x128xf32> to vector<7x7x128xf32>
    %174 = vector.extract_strided_slice %59 {offsets = [18, 0], sizes = [1, 128], strides = [1, 1]} : vector<25x128xf32> to vector<1x128xf32>
    %175 = vector.shape_cast %174 : vector<1x128xf32> to vector<1x1x128xf32>
    %176 = vector.broadcast %175 : vector<1x1x128xf32> to vector<7x7x128xf32>
    %177 = arith.mulf %173, %176 : vector<7x7x128xf32>
    %178 = arith.addf %172, %177 : vector<7x7x128xf32>
    %179 = vector.extract_strided_slice %154 {offsets = [4, 0, 0], sizes = [7, 7, 128], strides = [1, 1, 1]} : vector<11x7x128xf32> to vector<7x7x128xf32>
    %180 = vector.extract_strided_slice %59 {offsets = [23, 0], sizes = [1, 128], strides = [1, 1]} : vector<25x128xf32> to vector<1x128xf32>
    %181 = vector.shape_cast %180 : vector<1x128xf32> to vector<1x1x128xf32>
    %182 = vector.broadcast %181 : vector<1x1x128xf32> to vector<7x7x128xf32>
    %183 = arith.mulf %179, %182 : vector<7x7x128xf32>
    %184 = arith.addf %178, %183 : vector<7x7x128xf32>
    %c0_45 = arith.constant 0 : index
    %c4_46 = arith.constant 4 : index
    %c0_47 = arith.constant 0 : index
    %185 = vector.load %arg9[%c0_45, %c4_46, %c0_47] : memref<11x11x128xf32, #tpu.memory_space<vmem>>, vector<11x7x128xf32>
    %186 = vector.extract_strided_slice %185 {offsets = [0, 0, 0], sizes = [7, 7, 128], strides = [1, 1, 1]} : vector<11x7x128xf32> to vector<7x7x128xf32>
    %187 = vector.extract_strided_slice %59 {offsets = [4, 0], sizes = [1, 128], strides = [1, 1]} : vector<25x128xf32> to vector<1x128xf32>
    %188 = vector.shape_cast %187 : vector<1x128xf32> to vector<1x1x128xf32>
    %189 = vector.broadcast %188 : vector<1x1x128xf32> to vector<7x7x128xf32>
    %190 = arith.mulf %186, %189 : vector<7x7x128xf32>
    %191 = arith.addf %184, %190 : vector<7x7x128xf32>
    %192 = vector.extract_strided_slice %185 {offsets = [1, 0, 0], sizes = [7, 7, 128], strides = [1, 1, 1]} : vector<11x7x128xf32> to vector<7x7x128xf32>
    %193 = vector.extract_strided_slice %59 {offsets = [9, 0], sizes = [1, 128], strides = [1, 1]} : vector<25x128xf32> to vector<1x128xf32>
    %194 = vector.shape_cast %193 : vector<1x128xf32> to vector<1x1x128xf32>
    %195 = vector.broadcast %194 : vector<1x1x128xf32> to vector<7x7x128xf32>
    %196 = arith.mulf %192, %195 : vector<7x7x128xf32>
    %197 = arith.addf %191, %196 : vector<7x7x128xf32>
    %198 = vector.extract_strided_slice %185 {offsets = [2, 0, 0], sizes = [7, 7, 128], strides = [1, 1, 1]} : vector<11x7x128xf32> to vector<7x7x128xf32>
    %199 = vector.extract_strided_slice %59 {offsets = [14, 0], sizes = [1, 128], strides = [1, 1]} : vector<25x128xf32> to vector<1x128xf32>
    %200 = vector.shape_cast %199 : vector<1x128xf32> to vector<1x1x128xf32>
    %201 = vector.broadcast %200 : vector<1x1x128xf32> to vector<7x7x128xf32>
    %202 = arith.mulf %198, %201 : vector<7x7x128xf32>
    %203 = arith.addf %197, %202 : vector<7x7x128xf32>
    %204 = vector.extract_strided_slice %185 {offsets = [3, 0, 0], sizes = [7, 7, 128], strides = [1, 1, 1]} : vector<11x7x128xf32> to vector<7x7x128xf32>
    %205 = vector.extract_strided_slice %59 {offsets = [19, 0], sizes = [1, 128], strides = [1, 1]} : vector<25x128xf32> to vector<1x128xf32>
    %206 = vector.shape_cast %205 : vector<1x128xf32> to vector<1x1x128xf32>
    %207 = vector.broadcast %206 : vector<1x1x128xf32> to vector<7x7x128xf32>
    %208 = arith.mulf %204, %207 : vector<7x7x128xf32>
    %209 = arith.addf %203, %208 : vector<7x7x128xf32>
    %210 = vector.extract_strided_slice %185 {offsets = [4, 0, 0], sizes = [7, 7, 128], strides = [1, 1, 1]} : vector<11x7x128xf32> to vector<7x7x128xf32>
    %211 = vector.extract_strided_slice %59 {offsets = [24, 0], sizes = [1, 128], strides = [1, 1]} : vector<25x128xf32> to vector<1x128xf32>
    %212 = vector.shape_cast %211 : vector<1x128xf32> to vector<1x1x128xf32>
    %213 = vector.broadcast %212 : vector<1x1x128xf32> to vector<7x7x128xf32>
    %214 = arith.mulf %210, %213 : vector<7x7x128xf32>
    %215 = arith.addf %209, %214 : vector<7x7x128xf32>
    %cst_48 = arith.constant dense<0.000000e+00> : vector<128xf32>
    %216 = vector.multi_reduction <add>, %215, %cst_48 [0, 1] : vector<7x7x128xf32> to vector<128xf32>
    %217 = vector.shape_cast %216 : vector<128xf32> to vector<1x1x128xf32>
    %cst_49 = arith.constant 4.900000e+01 : f32
    %218 = vector.broadcast %cst_49 : f32 to vector<1x1x128xf32>
    %219 = arith.divf %217, %218 : vector<1x1x128xf32>
    %220 = vector.broadcast %219 : vector<1x1x128xf32> to vector<7x7x128xf32>
    %221 = arith.subf %215, %220 : vector<7x7x128xf32>
    %222 = arith.mulf %221, %221 : vector<7x7x128xf32>
    %cst_50 = arith.constant dense<0.000000e+00> : vector<128xf32>
    %223 = vector.multi_reduction <add>, %222, %cst_50 [0, 1] : vector<7x7x128xf32> to vector<128xf32>
    %224 = vector.shape_cast %223 : vector<128xf32> to vector<1x1x128xf32>
    %cst_51 = arith.constant 4.900000e+01 : f32
    %225 = vector.broadcast %cst_51 : f32 to vector<1x1x128xf32>
    %226 = arith.divf %224, %225 : vector<1x1x128xf32>
    %c0_52 = arith.constant 0 : index
    %c0_53 = arith.constant 0 : index
    %227 = vector.load %arg6[%c0_52, %c0_53] : memref<1x128xf32, #tpu.memory_space<vmem>>, vector<1x128xf32>
    %228 = vector.shape_cast %227 : vector<1x128xf32> to vector<1x1x128xf32>
    %c0_54 = arith.constant 0 : index
    %c0_55 = arith.constant 0 : index
    %229 = vector.load %arg7[%c0_54, %c0_55] : memref<1x128xf32, #tpu.memory_space<vmem>>, vector<1x128xf32>
    %230 = vector.shape_cast %229 : vector<1x128xf32> to vector<1x1x128xf32>
    %231 = vector.broadcast %219 : vector<1x1x128xf32> to vector<7x7x128xf32>
    %232 = arith.subf %215, %231 : vector<7x7x128xf32>
    %cst_56 = arith.constant 1.000000e-03 : f32
    %233 = vector.broadcast %cst_56 : f32 to vector<1x1x128xf32>
    %234 = arith.addf %226, %233 : vector<1x1x128xf32>
    %235 = math.rsqrt %234 : vector<1x1x128xf32>
    %236 = vector.broadcast %235 : vector<1x1x128xf32> to vector<7x7x128xf32>
    %237 = arith.mulf %232, %236 : vector<7x7x128xf32>
    %238 = vector.broadcast %228 : vector<1x1x128xf32> to vector<7x7x128xf32>
    %239 = arith.mulf %237, %238 : vector<7x7x128xf32>
    %240 = vector.broadcast %230 : vector<1x1x128xf32> to vector<7x7x128xf32>
    %241 = arith.addf %239, %240 : vector<7x7x128xf32>
    %cst_57 = arith.constant 0.000000e+00 : f32
    %242 = vector.broadcast %cst_57 : f32 to vector<7x7x128xf32>
    %243 = arith.maximumf %241, %242 : vector<7x7x128xf32>
    %c0_58 = arith.constant 0 : index
    %c0_59 = arith.constant 0 : index
    %c0_60 = arith.constant 0 : index
    %244 = vector.load %arg8[%c0_58, %c0_59, %c0_60] : memref<7x7x128xf32, #tpu.memory_space<vmem>>, vector<7x7x128xf32>
    tpu.vector_store %arg8[%c0_58, %c0_59, %c0_60], %243 {strides = array<i32>} : memref<7x7x128xf32, #tpu.memory_space<vmem>>, vector<7x7x128xf32>,
    return
  }
  func.func @transform_0(%arg0: i32) -> (i32, i32) {
    %c0_i32 = arith.constant 0 : i32
    %c0_i32_0 = arith.constant 0 : i32
    %c0_i32_1 = arith.constant 0 : i32
    return %c0_i32, %c0_i32_0 : i32, i32
  }
  func.func @transform_1(%arg0: i32) -> (i32, i32) {
    %c0_i32 = arith.constant 0 : i32
    %c0_i32_0 = arith.constant 0 : i32
    return %c0_i32, %arg0 : i32, i32
  }
  func.func @transform_2(%arg0: i32) -> (i32, i32) {
    %c0_i32 = arith.constant 0 : i32
    %c0_i32_0 = arith.constant 0 : i32
    return %c0_i32, %arg0 : i32, i32
  }
  func.func @transform_3(%arg0: i32) -> (i32, i32) {
    %c0_i32 = arith.constant 0 : i32
    %c0_i32_0 = arith.constant 0 : i32
    return %c0_i32, %arg0 : i32, i32
  }
  func.func @transform_4(%arg0: i32) -> (i32, i32) {
    %c0_i32 = arith.constant 0 : i32
    %c0_i32_0 = arith.constant 0 : i32
    return %c0_i32, %arg0 : i32, i32
  }
  func.func @transform_5(%arg0: i32) -> (i32, i32) {
    %c0_i32 = arith.constant 0 : i32
    %c0_i32_0 = arith.constant 0 : i32
    return %c0_i32, %arg0 : i32, i32
  }
  func.func @transform_6(%arg0: i32) -> (i32, i32) {
    %c0_i32 = arith.constant 0 : i32
    %c0_i32_0 = arith.constant 0 : i32
    return %c0_i32, %arg0 : i32, i32
  }
  func.func @transform_7(%arg0: i32) -> (i32, i32, i32) {
    %c0_i32 = arith.constant 0 : i32
    %c0_i32_0 = arith.constant 0 : i32
    %c0_i32_1 = arith.constant 0 : i32
    return %c0_i32, %c0_i32_0, %arg0 : i32, i32, i32
  }
}

</mosaic_0001>

<llo_original>
// kernel: forward.1
$region0: #{forward.1}
  #allocation0 [shape = 'u32[]', space=smem, size = 0x4, offset = 0x4, fixed_abs, tag = 'smem constant byte address 0x4 - core index']
  #allocation1 [shape = 'u32[144,128]{1,0:T(1,128)}', space=vmem, size = 0x12000, scoped, tag = 'internal scratch']
  #allocation2 [shape = 'f32[11,11,128]{2,1,0:T(8,128)}', space=vmem, size = 0x16000, scoped, tag = 'scratch operand']
  %s0 = inlined_call_operand.vmem [shape: f32[49,184], index: 0, kind: input, shape index: {}]
  %s1 = inlined_call_operand.vmem [shape: f32[184,1152], index: 1, kind: input, shape index: {}]
  %s2 = inlined_call_operand.vmem [shape: f32[1,1152], index: 2, kind: input, shape index: {}]
  %s3 = inlined_call_operand.vmem [shape: f32[1,1152], index: 3, kind: input, shape index: {}]
  %s4 = inlined_call_operand.vmem [shape: f32[25,1152], index: 4, kind: input, shape index: {}]
  %s5 = inlined_call_operand.vmem [shape: f32[1,1152], index: 5, kind: input, shape index: {}]
  %s6 = inlined_call_operand.vmem [shape: f32[1,1152], index: 6, kind: input, shape index: {}]
  %s7 = inlined_call_operand.vmem [shape: f32[7,7,1152], index: 7, kind: output, shape index: {}]
  %s8 = sld [smem:[#allocation0]]
  $region171: #{forward.1} parent=0
    _
  %s10 = ssub.s32 1, %s8
  %s11 = scalar_select 0, %s10, %s8
  $region1: #{forward.1} parent=0
    #allocation3 [shape = 'u8[188416]{0}', space=vmem, size = 0x2e000, scoped, tag = 'input window, operand 1']
    #allocation4 [shape = 'u8[32768]{0}', space=vmem, size = 0x8000, scoped, tag = 'input window, operand 4']
    #allocation5 [shape = 'u8[57344]{0}', space=vmem, size = 0xe000, scoped, tag = 'output window, operand 0']
    loop: start=0, step=1, limit=11
    $region2: #{forward.1} parent=1 // loop_pre_header
      _
    $region3: #{forward.1} parent=1 // loop_header
      %s13 = sphi 0, %s17
      %p14 = scmp.ge.s32.totalorder %s13, 11
      %s21 = sphi 0, %s21
      %s23 = sphi 0, %s21
      %s24 = sphi 0, %s23
      %s38 = sphi 0, %s24
      %s44 = sphi 0, %s46
      %s47 = sphi 0, %s44
      %s48 = sphi 0, %s47
      %s64 = sphi 0, %s48
      %s70 = sphi 0, %s72
      %s73 = sphi 0, %s70
      %s74 = sphi 0, %s73
      %s90 = sphi 0, %s74
      %s96 = sphi 0, %s98
      %s99 = sphi 0, %s96
      %s100 = sphi 0, %s99
      %s116 = sphi 0, %s100
      %s122 = sphi 0, %s124
      %s125 = sphi 0, %s122
      %s126 = sphi 0, %s125
      %s142 = sphi 0, %s126
      %s148 = sphi 0, %s150
      %s151 = sphi 0, %s148
      %s152 = sphi 0, %s151
      %s168 = sphi 0, %s152
      %s174 = sphi 0, %s176
      %s177 = sphi 0, %s174
      %s178 = sphi 0, %s177
      %s194 = sphi 0, %s178
      %s200 = sphi 0, %s202
      %s203 = sphi 0, %s200
      %s204 = sphi 0, %s203
      %s220 = sphi 0, %s204
    $region4: #{forward.1} parent=1 // loop_header_branch
      %16 = sbr.rel (%p14) target = $region8
    $region5: #{forward.1} parent=1 // loop_body
      %s18 = ssub.s32 %s13, 1
      %s19 = ssub.s32 %s13, 2
      %s20 = sadd.s32 %s13, 1
      %s22 = sadd.s32 %s21, 1
      %p25 = scmp.eq.s32.totalorder %s13, 8
      %p26 = scmp.ne.s32.totalorder %s21, %s23
      %p27 = scmp.eq.s32.totalorder %s13, 0
      %p28 = por %p26, %p27
      %p29 = scmp.ne.s32.totalorder %s21, %s23
      %p30 = scmp.eq.s32.totalorder %s18, 8
      %p31 = por %p29, %p30
      %p32 = scmp.ne.s32.totalorder %s23, %s24
      %p33 = scmp.eq.s32.totalorder %s18, 0
      %p34 = por %p32, %p33
      %p35 = scmp.ne.s32.totalorder %s23, %s24
      %p36 = scmp.eq.s32.totalorder %s19, 8
      %p37 = por %p35, %p36
      %p39 = scmp.ne.s32.totalorder %s24, %s38
      %p40 = scmp.eq.s32.totalorder %s19, 0
      %p41 = por %p39, %p40
      %s42 = ssub.s32 %s13, %s20
      %p43 = scmp.eq.s32.totalorder %s42, 0
      %s45 = sadd.s32 %s44, 1
      %s46 = scalar_select %p43, %s44, %s45
      %p49 = pneg %p43
      %p50 = scmp.eq.s32.totalorder %s13, 8
      %p51 = por %p49, %p50
      %p52 = scmp.ne.s32.totalorder %s44, %s47
      %p53 = scmp.eq.s32.totalorder %s13, 0
      %p54 = por %p52, %p53
      %p55 = scmp.ne.s32.totalorder %s44, %s47
      %p56 = scmp.eq.s32.totalorder %s18, 8
      %p57 = por %p55, %p56
      %p58 = scmp.ne.s32.totalorder %s47, %s48
      %p59 = scmp.eq.s32.totalorder %s18, 0
      %p60 = por %p58, %p59
      %p61 = scmp.ne.s32.totalorder %s47, %s48
      %p62 = scmp.eq.s32.totalorder %s19, 8
      %p63 = por %p61, %p62
      %p65 = scmp.ne.s32.totalorder %s48, %s64
      %p66 = scmp.eq.s32.totalorder %s19, 0
      %p67 = por %p65, %p66
      %s68 = ssub.s32 %s13, %s20
      %p69 = scmp.eq.s32.totalorder %s68, 0
      %s71 = sadd.s32 %s70, 1
      %s72 = scalar_select %p69, %s70, %s71
      %p75 = pneg %p69
      %p76 = scmp.eq.s32.totalorder %s13, 8
      %p77 = por %p75, %p76
      %p78 = scmp.ne.s32.totalorder %s70, %s73
      %p79 = scmp.eq.s32.totalorder %s13, 0
      %p80 = por %p78, %p79
      %p81 = scmp.ne.s32.totalorder %s70, %s73
      %p82 = scmp.eq.s32.totalorder %s18, 8
      %p83 = por %p81, %p82
      %p84 = scmp.ne.s32.totalorder %s73, %s74
      %p85 = scmp.eq.s32.totalorder %s18, 0
      %p86 = por %p84, %p85
      %p87 = scmp.ne.s32.totalorder %s73, %s74
      %p88 = scmp.eq.s32.totalorder %s19, 8
      %p89 = por %p87, %p88
      %p91 = scmp.ne.s32.totalorder %s74, %s90
      %p92 = scmp.eq.s32.totalorder %s19, 0
      %p93 = por %p91, %p92
      %s94 = ssub.s32 %s13, %s20
      %p95 = scmp.eq.s32.totalorder %s94, 0
      %s97 = sadd.s32 %s96, 1
      %s98 = scalar_select %p95, %s96, %s97
      %p101 = pneg %p95
      %p102 = scmp.eq.s32.totalorder %s13, 8
      %p103 = por %p101, %p102
      %p104 = scmp.ne.s32.totalorder %s96, %s99
      %p105 = scmp.eq.s32.totalorder %s13, 0
      %p106 = por %p104, %p105
      %p107 = scmp.ne.s32.totalorder %s96, %s99
      %p108 = scmp.eq.s32.totalorder %s18, 8
      %p109 = por %p107, %p108
      %p110 = scmp.ne.s32.totalorder %s99, %s100
      %p111 = scmp.eq.s32.totalorder %s18, 0
      %p112 = por %p110, %p111
      %p113 = scmp.ne.s32.totalorder %s99, %s100
      %p114 = scmp.eq.s32.totalorder %s19, 8
      %p115 = por %p113, %p114
      %p117 = scmp.ne.s32.totalorder %s100, %s116
      %p118 = scmp.eq.s32.totalorder %s19, 0
      %p119 = por %p117, %p118
      %s120 = ssub.s32 %s13, %s20
      %p121 = scmp.eq.s32.totalorder %s120, 0
      %s123 = sadd.s32 %s122, 1
      %s124 = scalar_select %p121, %s122, %s123
      %p127 = pneg %p121
      %p128 = scmp.eq.s32.totalorder %s13, 8
      %p129 = por %p127, %p128
      %p130 = scmp.ne.s32.totalorder %s122, %s125
      %p131 = scmp.eq.s32.totalorder %s13, 0
      %p132 = por %p130, %p131
      %p133 = scmp.ne.s32.totalorder %s122, %s125
      %p134 = scmp.eq.s32.totalorder %s18, 8
      %p135 = por %p133, %p134
      %p136 = scmp.ne.s32.totalorder %s125, %s126
      %p137 = scmp.eq.s32.totalorder %s18, 0
      %p138 = por %p136, %p137
      %p139 = scmp.ne.s32.totalorder %s125, %s126
      %p140 = scmp.eq.s32.totalorder %s19, 8
      %p141 = por %p139, %p140
      %p143 = scmp.ne.s32.totalorder %s126, %s142
      %p144 = scmp.eq.s32.totalorder %s19, 0
      %p145 = por %p143, %p144
      %s146 = ssub.s32 %s13, %s20
      %p147 = scmp.eq.s32.totalorder %s146, 0
      %s149 = sadd.s32 %s148, 1
      %s150 = scalar_select %p147, %s148, %s149
      %p153 = pneg %p147
      %p154 = scmp.eq.s32.totalorder %s13, 8
      %p155 = por %p153, %p154
      %p156 = scmp.ne.s32.totalorder %s148, %s151
      %p157 = scmp.eq.s32.totalorder %s13, 0
      %p158 = por %p156, %p157
      %p159 = scmp.ne.s32.totalorder %s148, %s151
      %p160 = scmp.eq.s32.totalorder %s18, 8
      %p161 = por %p159, %p160
      %p162 = scmp.ne.s32.totalorder %s151, %s152
      %p163 = scmp.eq.s32.totalorder %s18, 0
      %p164 = por %p162, %p163
      %p165 = scmp.ne.s32.totalorder %s151, %s152
      %p166 = scmp.eq.s32.totalorder %s19, 8
      %p167 = por %p165, %p166
      %p169 = scmp.ne.s32.totalorder %s152, %s168
      %p170 = scmp.eq.s32.totalorder %s19, 0
      %p171 = por %p169, %p170
      %s172 = ssub.s32 %s13, %s20
      %p173 = scmp.eq.s32.totalorder %s172, 0
      %s175 = sadd.s32 %s174, 1
      %s176 = scalar_select %p173, %s174, %s175
      %p179 = pneg %p173
      %p180 = scmp.eq.s32.totalorder %s13, 8
      %p181 = por %p179, %p180
      %p182 = scmp.ne.s32.totalorder %s174, %s177
      %p183 = scmp.eq.s32.totalorder %s13, 0
      %p184 = por %p182, %p183
      %p185 = scmp.ne.s32.totalorder %s174, %s177
      %p186 = scmp.eq.s32.totalorder %s18, 8
      %p187 = por %p185, %p186
      %p188 = scmp.ne.s32.totalorder %s177, %s178
      %p189 = scmp.eq.s32.totalorder %s18, 0
      %p190 = por %p188, %p189
      %p191 = scmp.ne.s32.totalorder %s177, %s178
      %p192 = scmp.eq.s32.totalorder %s19, 8
      %p193 = por %p191, %p192
      %p195 = scmp.ne.s32.totalorder %s178, %s194
      %p196 = scmp.eq.s32.totalorder %s19, 0
      %p197 = por %p195, %p196
      %s198 = ssub.s32 %s13, %s20
      %p199 = scmp.eq.s32.totalorder %s198, 0
      %s201 = sadd.s32 %s200, 1
      %s202 = scalar_select %p199, %s200, %s201
      %p205 = pneg %p199
      %p206 = scmp.eq.s32.totalorder %s13, 8
      %p207 = por %p205, %p206
      %p208 = scmp.ne.s32.totalorder %s200, %s203
      %p209 = scmp.eq.s32.totalorder %s13, 0
      %p210 = por %p208, %p209
      %p211 = scmp.ne.s32.totalorder %s200, %s203
      %p212 = scmp.eq.s32.totalorder %s18, 8
      %p213 = por %p211, %p212
      %p214 = scmp.ne.s32.totalorder %s203, %s204
      %p215 = scmp.eq.s32.totalorder %s18, 0
      %p216 = por %p214, %p215
      %p217 = scmp.ne.s32.totalorder %s203, %s204
      %p218 = scmp.eq.s32.totalorder %s19, 8
      %p219 = por %p217, %p218
      %p221 = scmp.ne.s32.totalorder %s204, %s220
      %p222 = scmp.eq.s32.totalorder %s19, 0
      %p223 = por %p221, %p222
      %p224 = scmp.le.s32.totalorder 1, %s13
      %p225 = scmp.lt.s32.totalorder %s13, 10
      %p226 = pnand %p224, %p225
      %p227 = pneg %p226
      // Predicated region
      $region9: #{forward.1} parent=5 // pred_check
        _
      $region10: #{forward.1} parent=5 // pred_check_branch
        %229 = sbr.rel (%p226) target = $region12
      $region11: #{forward.1} parent=5 // pred_region
        %s230 = ssub.s32 %s13, 1
        // Predicated region
        $region13: #{forward.1} parent=11 // pred_check
          %p231 = pneg %p34
        $region14: #{forward.1} parent=11 // pred_check_branch
          %233 = sbr.rel (%p231) target = $region16
        $region15: #{forward.1} parent=11 // pred_region
          _
        $region16: #{forward.1} parent=11 // pred_fallthru
          _
      $region12: #{forward.1} parent=5 // pred_fallthru
        _
      %p234 = scmp.lt.s32.totalorder %s13, 9
      // Predicated region
      $region17: #{forward.1} parent=5 // pred_check
        %p235 = pneg %p234
      $region18: #{forward.1} parent=5 // pred_check_branch
        %237 = sbr.rel (%p235) target = $region20
      $region19: #{forward.1} parent=5 // pred_region
        // Predicated region
        $region21: #{forward.1} parent=19 // pred_check
          %p238 = pneg %p54
        $region22: #{forward.1} parent=19 // pred_check_branch
          %240 = sbr.rel (%p238) target = $region24
        $region23: #{forward.1} parent=19 // pred_region
          %s241 = sand.u32 %s44, 1
          %s242 = sand.u32 %s44, 1
          %s243 = smul.addr %s242, 184
          %s244 = scalar_lea.vmem [#allocation3], %s243
          %s245 = smul.addr %s13, 8
          %s246 = scalar_lea.vmem %s1, %s245
          // Predicated region
          $region25: #{forward.1} parent=23 // pred_check
            _
          $region26: #{forward.1} parent=23 // pred_check_branch
            %248 = sbr.rel (0) target = $region28
          $region27: #{forward.1} parent=23 // pred_region
            // Predicated region
            $region29: #{forward.1} parent=27 // pred_check
              _
            $region30: #{forward.1} parent=27 // pred_check_branch
              %250 = sbr.rel (0) target = $region32
            $region31: #{forward.1} parent=27 // pred_region
              // Predicated region
              $region44: #{forward.1} parent=31 // pred_check
                _
              $region45: #{forward.1} parent=31 // pred_check_branch
                %309 = sbr.rel (0) target = $region47
              $region46: #{forward.1} parent=31 // pred_region
                loop: start=0, step=1, limit=1
                $region48: #{forward.1} parent=46 // loop_pre_header
                  _
                $region49: #{forward.1} parent=46 // loop_header
                  %s311 = sphi 0, %s315
                  %p312 = scmp.ge.s32.totalorder %s311, 1
                  %s316 = sphi %s246, %s246
                  %s317 = sphi %s244, %s244
                $region50: #{forward.1} parent=46 // loop_header_branch
                  %314 = sbr.rel (%p312) target = $region54
                $region51: #{forward.1} parent=46 // loop_body
                  %v318 = vld [vmem:[%s316] sm:$0xff]
                  %319 = vst [vmem:[%s317] sm:$0xff] %v318
                  %v320 = vld [vmem:[%s316 + $0x48] sm:$0xff]
                  %321 = vst [vmem:[%s317 + $0x8] sm:$0xff] %v320
                  %v322 = vld [vmem:[%s316 + $0x90] sm:$0xff]
                  %323 = vst [vmem:[%s317 + $0x10] sm:$0xff] %v322
                  %v324 = vld [vmem:[%s316 + $0xd8] sm:$0xff]
                  %325 = vst [vmem:[%s317 + $0x18] sm:$0xff] %v324
                  %v326 = vld [vmem:[%s316 + $0x120] sm:$0xff]
                  %327 = vst [vmem:[%s317 + $0x20] sm:$0xff] %v326
                  %v328 = vld [vmem:[%s316 + $0x168] sm:$0xff]
                  %329 = vst [vmem:[%s317 + $0x28] sm:$0xff] %v328
                  %v330 = vld [vmem:[%s316 + $0x1b0] sm:$0xff]
                  %331 = vst [vmem:[%s317 + $0x30] sm:$0xff] %v330
                  %v332 = vld [vmem:[%s316 + $0x1f8] sm:$0xff]
                  %333 = vst [vmem:[%s317 + $0x38] sm:$0xff] %v332
                  %v334 = vld [vmem:[%s316 + $0x240] sm:$0xff]
                  %335 = vst [vmem:[%s317 + $0x40] sm:$0xff] %v334
                  %v336 = vld [vmem:[%s316 + $0x288] sm:$0xff]
                  %337 = vst [vmem:[%s317 + $0x48] sm:$0xff] %v336
                  %v338 = vld [vmem:[%s316 + $0x2d0] sm:$0xff]
                  %339 = vst [vmem:[%s317 + $0x50] sm:$0xff] %v338
                  %v340 = vld [vmem:[%s316 + $0x318] sm:$0xff]
                  %341 = vst [vmem:[%s317 + $0x58] sm:$0xff] %v340
                  %v342 = vld [vmem:[%s316 + $0x360] sm:$0xff]
                  %343 = vst [vmem:[%s317 + $0x60] sm:$0xff] %v342
                  %v344 = vld [vmem:[%s316 + $0x3a8] sm:$0xff]
                  %345 = vst [vmem:[%s317 + $0x68] sm:$0xff] %v344
                  %v346 = vld [vmem:[%s316 + $0x3f0] sm:$0xff]
                  %347 = vst [vmem:[%s317 + $0x70] sm:$0xff] %v346
                  %v348 = vld [vmem:[%s316 + $0x438] sm:$0xff]
                  %349 = vst [vmem:[%s317 + $0x78] sm:$0xff] %v348
                  %v350 = vld [vmem:[%s316 + $0x480] sm:$0xff]
                  %351 = vst [vmem:[%s317 + $0x80] sm:$0xff] %v350
                  %v352 = vld [vmem:[%s316 + $0x4c8] sm:$0xff]
                  %353 = vst [vmem:[%s317 + $0x88] sm:$0xff] %v352
                  %v354 = vld [vmem:[%s316 + $0x510] sm:$0xff]
                  %355 = vst [vmem:[%s317 + $0x90] sm:$0xff] %v354
                  %v356 = vld [vmem:[%s316 + $0x558] sm:$0xff]
                  %357 = vst [vmem:[%s317 + $0x98] sm:$0xff] %v356
                  %v358 = vld [vmem:[%s316 + $0x5a0] sm:$0xff]
                  %359 = vst [vmem:[%s317 + $0xa0] sm:$0xff] %v358
                  %v360 = vld [vmem:[%s316 + $0x5e8] sm:$0xff]
                  %361 = vst [vmem:[%s317 + $0xa8] sm:$0xff] %v360
                  %v362 = vld [vmem:[%s316 + $0x630] sm:$0xff]
                  %363 = vst [vmem:[%s317 + $0xb0] sm:$0xff] %v362
                $region52: #{forward.1} parent=46 // loop_footer
                  %s315 = sadd.s32 1, %s311
                $region53: #{forward.1} parent=46 // loop_footer_branch
                  %310 = sbr.rel target = $region49
                $region54: #{forward.1} parent=46 // loop_exit
                  _
              $region47: #{forward.1} parent=31 // pred_fallthru
                _
              // Predicated region
              $region55: #{forward.1} parent=31 // pred_check
                _
              $region56: #{forward.1} parent=31 // pred_check_branch
                %365 = sbr.rel target = $region58
              $region57: #{forward.1} parent=31 // pred_region
                _
              $region58: #{forward.1} parent=31 // pred_fallthru
                _
            $region32: #{forward.1} parent=27 // pred_fallthru
              _
            // Predicated region
            $region33: #{forward.1} parent=27 // pred_check
              _
            $region34: #{forward.1} parent=27 // pred_check_branch
              %252 = sbr.rel target = $region36
            $region35: #{forward.1} parent=27 // pred_region
              loop: start=0, step=1, limit=1
              $region37: #{forward.1} parent=35 // loop_pre_header
                _
              $region38: #{forward.1} parent=35 // loop_header
                %s255 = sphi 0, %s259
                %p256 = scmp.ge.s32.totalorder %s255, 1
                %s260 = sphi %s246, %s246
                %s261 = sphi %s244, %s244
              $region39: #{forward.1} parent=35 // loop_header_branch
                %258 = sbr.rel (%p256) target = $region43
              $region40: #{forward.1} parent=35 // loop_body
                %v262 = vld [vmem:[%s260] sm:$0xff]
                %263 = vst [vmem:[%s261] sm:$0xff] %v262
                %v264 = vld [vmem:[%s260 + $0x48] sm:$0xff]
                %265 = vst [vmem:[%s261 + $0x8] sm:$0xff] %v264
                %v266 = vld [vmem:[%s260 + $0x90] sm:$0xff]
                %267 = vst [vmem:[%s261 + $0x10] sm:$0xff] %v266
                %v268 = vld [vmem:[%s260 + $0xd8] sm:$0xff]
                %269 = vst [vmem:[%s261 + $0x18] sm:$0xff] %v268
                %v270 = vld [vmem:[%s260 + $0x120] sm:$0xff]
                %271 = vst [vmem:[%s261 + $0x20] sm:$0xff] %v270
                %v272 = vld [vmem:[%s260 + $0x168] sm:$0xff]
                %273 = vst [vmem:[%s261 + $0x28] sm:$0xff] %v272
                %v274 = vld [vmem:[%s260 + $0x1b0] sm:$0xff]
                %275 = vst [vmem:[%s261 + $0x30] sm:$0xff] %v274
                %v276 = vld [vmem:[%s260 + $0x1f8] sm:$0xff]
                %277 = vst [vmem:[%s261 + $0x38] sm:$0xff] %v276
                %v278 = vld [vmem:[%s260 + $0x240] sm:$0xff]
                %279 = vst [vmem:[%s261 + $0x40] sm:$0xff] %v278
                %v280 = vld [vmem:[%s260 + $0x288] sm:$0xff]
                %281 = vst [vmem:[%s261 + $0x48] sm:$0xff] %v280
                %v282 = vld [vmem:[%s260 + $0x2d0] sm:$0xff]
                %283 = vst [vmem:[%s261 + $0x50] sm:$0xff] %v282
                %v284 = vld [vmem:[%s260 + $0x318] sm:$0xff]
                %285 = vst [vmem:[%s261 + $0x58] sm:$0xff] %v284
                %v286 = vld [vmem:[%s260 + $0x360] sm:$0xff]
                %287 = vst [vmem:[%s261 + $0x60] sm:$0xff] %v286
                %v288 = vld [vmem:[%s260 + $0x3a8] sm:$0xff]
                %289 = vst [vmem:[%s261 + $0x68] sm:$0xff] %v288
                %v290 = vld [vmem:[%s260 + $0x3f0] sm:$0xff]
                %291 = vst [vmem:[%s261 + $0x70] sm:$0xff] %v290
                %v292 = vld [vmem:[%s260 + $0x438] sm:$0xff]
                %293 = vst [vmem:[%s261 + $0x78] sm:$0xff] %v292
                %v294 = vld [vmem:[%s260 + $0x480] sm:$0xff]
                %295 = vst [vmem:[%s261 + $0x80] sm:$0xff] %v294
                %v296 = vld [vmem:[%s260 + $0x4c8] sm:$0xff]
                %297 = vst [vmem:[%s261 + $0x88] sm:$0xff] %v296
                %v298 = vld [vmem:[%s260 + $0x510] sm:$0xff]
                %299 = vst [vmem:[%s261 + $0x90] sm:$0xff] %v298
                %v300 = vld [vmem:[%s260 + $0x558] sm:$0xff]
                %301 = vst [vmem:[%s261 + $0x98] sm:$0xff] %v300
                %v302 = vld [vmem:[%s260 + $0x5a0] sm:$0xff]
                %303 = vst [vmem:[%s261 + $0xa0] sm:$0xff] %v302
                %v304 = vld [vmem:[%s260 + $0x5e8] sm:$0xff]
                %305 = vst [vmem:[%s261 + $0xa8] sm:$0xff] %v304
                %v306 = vld [vmem:[%s260 + $0x630] sm:$0xff]
                %307 = vst [vmem:[%s261 + $0xb0] sm:$0xff] %v306
              $region41: #{forward.1} parent=35 // loop_footer
                %s259 = sadd.s32 1, %s255
              $region42: #{forward.1} parent=35 // loop_footer_branch
                %254 = sbr.rel target = $region38
              $region43: #{forward.1} parent=35 // loop_exit
                _
            $region36: #{forward.1} parent=27 // pred_fallthru
              _
          $region28: #{forward.1} parent=23 // pred_fallthru
            _
          %366 = vnop
        $region24: #{forward.1} parent=19 // pred_fallthru
          _
        // Predicated region
        $region59: #{forward.1} parent=19 // pred_check
          %p367 = pneg %p80
        $region60: #{forward.1} parent=19 // pred_check_branch
          %369 = sbr.rel (%p367) target = $region62
        $region61: #{forward.1} parent=19 // pred_region
          %p370 = scmp.lt.s32.totalorder %s13, 8
          %s371 = scalar_select %p370, %s13, 8
          %s372 = scalar_lea.vmem %s2, %s371
        $region62: #{forward.1} parent=19 // pred_fallthru
          _
        // Predicated region
        $region63: #{forward.1} parent=19 // pred_check
          %p373 = pneg %p106
        $region64: #{forward.1} parent=19 // pred_check_branch
          %375 = sbr.rel (%p373) target = $region66
        $region65: #{forward.1} parent=19 // pred_region
          %p376 = scmp.lt.s32.totalorder %s13, 8
          %s377 = scalar_select %p376, %s13, 8
          %s378 = scalar_lea.vmem %s3, %s377
        $region66: #{forward.1} parent=19 // pred_fallthru
          _
        // Predicated region
        $region67: #{forward.1} parent=19 // pred_check
          %p379 = pneg %p132
        $region68: #{forward.1} parent=19 // pred_check_branch
          %381 = sbr.rel (%p379) target = $region70
        $region69: #{forward.1} parent=19 // pred_region
          %s382 = sand.u32 %s122, 1
          %s383 = sand.u32 %s122, 1
          %s384 = smul.addr %s383, 32
          %s385 = scalar_lea.vmem [#allocation4], %s384
          %s386 = smul.addr %s13, 8
          %s387 = scalar_lea.vmem %s4, %s386
          // Predicated region
          $region71: #{forward.1} parent=69 // pred_check
            _
          $region72: #{forward.1} parent=69 // pred_check_branch
            %389 = sbr.rel (0) target = $region74
          $region73: #{forward.1} parent=69 // pred_region
            // Predicated region
            $region75: #{forward.1} parent=73 // pred_check
              _
            $region76: #{forward.1} parent=73 // pred_check_branch
              %391 = sbr.rel (0) target = $region78
            $region77: #{forward.1} parent=73 // pred_region
              // Predicated region
              $region90: #{forward.1} parent=77 // pred_check
                _
              $region91: #{forward.1} parent=77 // pred_check_branch
                %412 = sbr.rel (0) target = $region93
              $region92: #{forward.1} parent=77 // pred_region
                loop: start=0, step=1, limit=1
                $region94: #{forward.1} parent=92 // loop_pre_header
                  _
                $region95: #{forward.1} parent=92 // loop_header
                  %s414 = sphi 0, %s418
                  %p415 = scmp.ge.s32.totalorder %s414, 1
                  %s419 = sphi %s387, %s387
                  %s420 = sphi %s385, %s385
                $region96: #{forward.1} parent=92 // loop_header_branch
                  %417 = sbr.rel (%p415) target = $region100
                $region97: #{forward.1} parent=92 // loop_body
                  %v421 = vld [vmem:[%s419] sm:$0xff]
                  %422 = vst [vmem:[%s420] sm:$0xff] %v421
                  %v423 = vld [vmem:[%s419 + $0x48] sm:$0xff]
                  %424 = vst [vmem:[%s420 + $0x8] sm:$0xff] %v423
                  %v425 = vld [vmem:[%s419 + $0x90] sm:$0xff]
                  %426 = vst [vmem:[%s420 + $0x10] sm:$0xff] %v425
                  %v427 = vld [vmem:[%s419 + $0xd8] sm:$0xff]
                  %428 = vst [vmem:[%s420 + $0x18] sm:$0xff] %v427
                $region98: #{forward.1} parent=92 // loop_footer
                  %s418 = sadd.s32 1, %s414
                $region99: #{forward.1} parent=92 // loop_footer_branch
                  %413 = sbr.rel target = $region95
                $region100: #{forward.1} parent=92 // loop_exit
                  _
              $region93: #{forward.1} parent=77 // pred_fallthru
                _
              // Predicated region
              $region101: #{forward.1} parent=77 // pred_check
                _
              $region102: #{forward.1} parent=77 // pred_check_branch
                %430 = sbr.rel target = $region104
              $region103: #{forward.1} parent=77 // pred_region
                _
              $region104: #{forward.1} parent=77 // pred_fallthru
                _
            $region78: #{forward.1} parent=73 // pred_fallthru
              _
            // Predicated region
            $region79: #{forward.1} parent=73 // pred_check
              _
            $region80: #{forward.1} parent=73 // pred_check_branch
              %393 = sbr.rel target = $region82
            $region81: #{forward.1} parent=73 // pred_region
              loop: start=0, step=1, limit=1
              $region83: #{forward.1} parent=81 // loop_pre_header
                _
              $region84: #{forward.1} parent=81 // loop_header
                %s396 = sphi 0, %s400
                %p397 = scmp.ge.s32.totalorder %s396, 1
                %s401 = sphi %s387, %s387
                %s402 = sphi %s385, %s385
              $region85: #{forward.1} parent=81 // loop_header_branch
                %399 = sbr.rel (%p397) target = $region89
              $region86: #{forward.1} parent=81 // loop_body
                %v403 = vld [vmem:[%s401] sm:$0xff]
                %404 = vst [vmem:[%s402] sm:$0xff] %v403
                %v405 = vld [vmem:[%s401 + $0x48] sm:$0xff]
                %406 = vst [vmem:[%s402 + $0x8] sm:$0xff] %v405
                %v407 = vld [vmem:[%s401 + $0x90] sm:$0xff]
                %408 = vst [vmem:[%s402 + $0x10] sm:$0xff] %v407
                %v409 = vld [vmem:[%s401 + $0xd8] sm:$0xff]
                %410 = vst [vmem:[%s402 + $0x18] sm:$0xff] %v409
              $region87: #{forward.1} parent=81 // loop_footer
                %s400 = sadd.s32 1, %s396
              $region88: #{forward.1} parent=81 // loop_footer_branch
                %395 = sbr.rel target = $region84
              $region89: #{forward.1} parent=81 // loop_exit
                _
            $region82: #{forward.1} parent=73 // pred_fallthru
              _
          $region74: #{forward.1} parent=69 // pred_fallthru
            _
          %431 = vnop
        $region70: #{forward.1} parent=19 // pred_fallthru
          _
        // Predicated region
        $region105: #{forward.1} parent=19 // pred_check
          %p432 = pneg %p158
        $region106: #{forward.1} parent=19 // pred_check_branch
          %434 = sbr.rel (%p432) target = $region108
        $region107: #{forward.1} parent=19 // pred_region
          %p435 = scmp.lt.s32.totalorder %s13, 8
          %s436 = scalar_select %p435, %s13, 8
          %s437 = scalar_lea.vmem %s5, %s436
        $region108: #{forward.1} parent=19 // pred_fallthru
          _
        // Predicated region
        $region109: #{forward.1} parent=19 // pred_check
          %p438 = pneg %p184
        $region110: #{forward.1} parent=19 // pred_check_branch
          %440 = sbr.rel (%p438) target = $region112
        $region111: #{forward.1} parent=19 // pred_region
          %p441 = scmp.lt.s32.totalorder %s13, 8
          %s442 = scalar_select %p441, %s13, 8
          %s443 = scalar_lea.vmem %s6, %s442
        $region112: #{forward.1} parent=19 // pred_fallthru
          _
      $region20: #{forward.1} parent=5 // pred_fallthru
        _
      %p444 = scmp.le.s32.totalorder 1, %s13
      %p445 = scmp.lt.s32.totalorder %s13, 10
      %p446 = pnand %p444, %p445
      %p447 = pneg %p446
      // Predicated region
      $region113: #{forward.1} parent=5 // pred_check
        _
      $region114: #{forward.1} parent=5 // pred_check_branch
        %449 = sbr.rel (%p446) target = $region116
      $region115: #{forward.1} parent=5 // pred_region
        %s450 = ssub.s32 %s13, 1
        %s451 = sand.u32 %s47, 1
        %s452 = sand.u32 %s47, 1
        %s453 = smul.addr %s452, 184
        %s454 = scalar_lea.vmem [#allocation3], %s453
        // Predicated region
        $region117: #{forward.1} parent=115 // pred_check
          %p455 = pneg %p60
        $region118: #{forward.1} parent=115 // pred_check_branch
          %457 = sbr.rel (%p455) target = $region120
        $region119: #{forward.1} parent=115 // pred_region
          _
        $region120: #{forward.1} parent=115 // pred_fallthru
          _
        %s458 = sand.u32 %s125, 1
        %s459 = sand.u32 %s125, 1
        %s460 = smul.addr %s459, 32
        %s461 = scalar_lea.vmem [#allocation4], %s460
        // Predicated region
        $region121: #{forward.1} parent=115 // pred_check
          %p462 = pneg %p138
        $region122: #{forward.1} parent=115 // pred_check_branch
          %464 = sbr.rel (%p462) target = $region124
        $region123: #{forward.1} parent=115 // pred_region
          _
        $region124: #{forward.1} parent=115 // pred_fallthru
          _
        %p465 = pneg %p34
        %p466 = pneg %p31
        %s467 = sand.u32 %s47, 1
        %s468 = sand.u32 %s47, 1
        %s469 = smul.addr %s468, 184
        %s470 = scalar_lea.vmem [#allocation3], %s469
        %p471 = pneg %p60
        %p472 = pneg %p57
        %p473 = scmp.lt.s32.totalorder %s18, 8
        %s474 = scalar_select %p473, %s18, 8
        %s475 = scalar_lea.vmem %s2, %s474
        %p476 = pneg %p86
        %p477 = pneg %p83
        %p478 = scmp.lt.s32.totalorder %s18, 8
        %s479 = scalar_select %p478, %s18, 8
        %s480 = scalar_lea.vmem %s3, %s479
        %p481 = pneg %p112
        %p482 = pneg %p109
        %s483 = sand.u32 %s125, 1
        %s484 = sand.u32 %s125, 1
        %s485 = smul.addr %s484, 32
        %s486 = scalar_lea.vmem [#allocation4], %s485
        %p487 = pneg %p138
        %p488 = pneg %p135
        %p489 = scmp.lt.s32.totalorder %s18, 8
        %s490 = scalar_select %p489, %s18, 8
        %s491 = scalar_lea.vmem %s5, %s490
        %p492 = pneg %p164
        %p493 = pneg %p161
        %p494 = scmp.lt.s32.totalorder %s18, 8
        %s495 = scalar_select %p494, %s18, 8
        %s496 = scalar_lea.vmem %s6, %s495
        %p497 = pneg %p190
        %p498 = pneg %p187
        %p499 = pneg %p216
        %p500 = pneg %p213
        %s501 = sand.u32 %s203, 1
        %s502 = sand.u32 %s203, 1
        %s503 = smul.addr %s502, 56
        %s504 = scalar_lea.vmem [#allocation5], %s503
        %p505 = scmp.lt.s32.totalorder %s18, 8
        %s506 = scalar_select %p505, %s18, 8
        %s507 = scalar_lea.vmem %s2, %s506
        %p508 = scmp.lt.s32.totalorder %s18, 8
        %s509 = scalar_select %p508, %s18, 8
        %s510 = scalar_lea.vmem %s3, %s509
        %p511 = scmp.lt.s32.totalorder %s18, 8
        %s512 = scalar_select %p511, %s18, 8
        %s513 = scalar_lea.vmem %s5, %s512
        %p514 = scmp.lt.s32.totalorder %s18, 8
        %s515 = scalar_select %p514, %s18, 8
        %s516 = scalar_lea.vmem %s6, %s515
        %v517 = vld [vmem:[%s0] sm:$0xff]
        %v518 = vld [vmem:[%s0 + $0x8] sm:$0xff]
        %v519 = vld [vmem:[%s0 + $0x10] sm:$0xff]
        %v520 = vld [vmem:[%s0 + $0x18] sm:$0xff]
        %v521 = vld [vmem:[%s0 + $0x20] sm:$0xff]
        %v522 = vld [vmem:[%s0 + $0x28] sm:$0xff]
        %v523 = vld [vmem:[%s0 + $0x30] sm:$0xff]
        %v524 = vld [vmem:[%s0 + $0x38] sm:$0xff]
        %v525 = vld [vmem:[%s0 + $0x40] sm:$0xff]
        %v526 = vld [vmem:[%s0 + $0x48] sm:$0xff]
        %v527 = vld [vmem:[%s0 + $0x50] sm:$0xff]
        %v528 = vld [vmem:[%s0 + $0x58] sm:$0xff]
        %v529 = vld [vmem:[%s0 + $0x60] sm:$0x1]
        %v530 = vld [vmem:[%s0 + $0x68] sm:$0x1]
        %v531 = vld [vmem:[%s454] sm:$0xff]
        %v532 = vld [vmem:[%s454 + $0x8] sm:$0xff]
        %v533 = vld [vmem:[%s454 + $0x10] sm:$0xff]
        %v534 = vld [vmem:[%s454 + $0x18] sm:$0xff]
        %v535 = vld [vmem:[%s454 + $0x20] sm:$0xff]
        %v536 = vld [vmem:[%s454 + $0x28] sm:$0xff]
        %v537 = vld [vmem:[%s454 + $0x30] sm:$0xff]
        %v538 = vld [vmem:[%s454 + $0x38] sm:$0xff]
        %v539 = vld [vmem:[%s454 + $0x40] sm:$0xff]
        %v540 = vld [vmem:[%s454 + $0x48] sm:$0xff]
        %v541 = vld [vmem:[%s454 + $0x50] sm:$0xff]
        %v542 = vld [vmem:[%s454 + $0x58] sm:$0xff]
        %v543 = vld [vmem:[%s454 + $0x60] sm:$0xff]
        %v544 = vld [vmem:[%s454 + $0x68] sm:$0xff]
        %v545 = vld [vmem:[%s454 + $0x70] sm:$0xff]
        %v546 = vld [vmem:[%s454 + $0x78] sm:$0xff]
        %v547 = vld [vmem:[%s454 + $0x80] sm:$0xff]
        %v548 = vld [vmem:[%s454 + $0x88] sm:$0xff]
        %v549 = vld [vmem:[%s454 + $0x90] sm:$0xff]
        %v550 = vld [vmem:[%s454 + $0x98] sm:$0xff]
        %v551 = vld [vmem:[%s454 + $0xa0] sm:$0xff]
        %v552 = vld [vmem:[%s454 + $0xa8] sm:$0xff]
        %v553 = vld [vmem:[%s454 + $0xb0] sm:$0xff]
        %vm554 = vcmask 457728
        %v556 = vsel %vm554, %v518, 0
        %v559 = vsel %vm554, %v520, 0
        %v562 = vsel %vm554, %v522, 0
        %v565 = vsel %vm554, %v524, 0
        %v568 = vsel %vm554, %v526, 0
        %v571 = vsel %vm554, %v528, 0
        %v574 = vsel %vm554, %v530, 0
        %576 = vmatprep.subr.mxu0 0.0
        %577 = vmatpush1.msra.mxu0 %v531
        %578 = vmatprep.subr.mxu0 0.0
        %579 = vmatpush1.msra.mxu0 %v532
        %580 = vmatprep.subr.mxu0 0.0
        %581 = vmatpush1.msra.mxu0 %v533
        %582 = vmatprep.subr.mxu0 0.0
        %583 = vmatpush1.msra.mxu0 %v534
        %584 = vmatprep.subr.mxu0 0.0
        %585 = vmatpush1.msra.mxu0 %v535
        %586 = vmatprep.subr.mxu0 0.0
        %587 = vmatpush1.msra.mxu0 %v536
        %588 = vmatprep.subr.mxu0 0.0
        %589 = vmatpush1.msra.mxu0 %v537
        %590 = vmatprep.subr.mxu0 0.0
        %591 = vmatpush1.msra.mxu0 %v538
        %592 = vmatprep.subr.mxu0 0.0
        %593 = vmatpush1.msra.mxu0 %v539
        %594 = vmatprep.subr.mxu0 0.0
        %595 = vmatpush1.msra.mxu0 %v540
        %596 = vmatprep.subr.mxu0 0.0
        %597 = vmatpush1.msra.mxu0 %v541
        %598 = vmatprep.subr.mxu0 0.0
        %599 = vmatpush1.msra.mxu0 %v542
        %600 = vmatprep.subr.mxu0 0.0
        %601 = vmatpush1.msra.mxu0 %v543
        %602 = vmatprep.subr.mxu0 0.0
        %603 = vmatpush1.msra.mxu0 %v544
        %604 = vmatprep.subr.mxu0 0.0
        %605 = vmatpush1.msra.mxu0 %v545
        %606 = vmatprep.subr.mxu0 0.0
        %607 = vmatpush1.msra.mxu0 %v546
        %608 = vmatprep.subr.mxu0 0.0
        %609 = vmatpush1.msra.mxu0 %v547
        %610 = vmatprep.subr.mxu0 0.0
        %611 = vmatpush1.msra.mxu0 %v548
        %612 = vmatprep.subr.mxu0 0.0
        %613 = vmatpush1.msra.mxu0 %v549
        %614 = vmatprep.subr.mxu0 0.0
        %615 = vmatpush1.msra.mxu0 %v550
        %616 = vmatprep.subr.mxu0 0.0
        %617 = vmatpush1.msra.mxu0 %v551
        %618 = vmatprep.subr.mxu0 0.0
        %619 = vmatpush1.msra.mxu0 %v552
        %620 = vmatprep.subr.mxu0 0.0
        %621 = vmatpush1.msra.mxu0 %v553
        %622 = vmatprep.subr.mxu0 0.0
        %623 = vmatpush1.msra.mxu0 0.0
        %624 = vmatprep.subr.mxu0 0.0
        %625 = vmatpush1.msra.mxu0 0.0
        %626 = vmatprep.subr.mxu0 0.0
        %627 = vmatpush1.msra.mxu0 0.0
        %628 = vmatprep.subr.mxu0 0.0
        %629 = vmatpush1.msra.mxu0 0.0
        %630 = vmatprep.subr.mxu0 0.0
        %631 = vmatpush1.msra.mxu0 0.0
        %632 = vmatprep.subr.mxu0 0.0
        %633 = vmatpush1.msra.mxu0 0.0
        %634 = vmatprep.subr.mxu0 0.0
        %635 = vmatpush1.msra.mxu0 0.0
        %636 = vmatprep.subr.mxu0 0.0
        %637 = vmatpush1.msra.mxu0 0.0
        %638 = vmatprep.subr.mxu0 0.0
        %639 = vmatpush1.msra.mxu0 0.0
        %640 = vmatprep.mubr.f32.mxu0 %v556
        %641 = vmatmul.mubr.f32.gmra.mrb[0].mxu0 %v517
        %v642 = vpop.f32.mrb[0].mxu0
        %v643 = vadd.f32 0.0, %v642
        %v644 = vpop.f32.mrb[0].mxu0
        %645 = vmatprep.mubr.f32.mxu0 %v559
        %646 = vmatmul.mubr.f32.gmra.mrb[0].mxu0 %v519
        %v647 = vpop.f32.mrb[0].mxu0
        %v648 = vadd.f32 0.0, %v647
        %v649 = vpop.f32.mrb[0].mxu0
        %650 = vmatprep.mubr.f32.mxu0 %v562
        %651 = vmatmul.mubr.f32.gmra.mrb[0].mxu0 %v521
        %v652 = vpop.f32.mrb[0].mxu0
        %v653 = vadd.f32 0.0, %v652
        %v654 = vpop.f32.mrb[0].mxu0
        %655 = vmatprep.mubr.f32.mxu0 %v565
        %656 = vmatmul.mubr.f32.gmra.mrb[0].mxu0 %v523
        %v657 = vpop.f32.mrb[0].mxu0
        %v658 = vadd.f32 0.0, %v657
        %v659 = vpop.f32.mrb[0].mxu0
        %660 = vmatprep.mubr.f32.mxu0 %v568
        %661 = vmatmul.mubr.f32.gmra.mrb[0].mxu0 %v525
        %v662 = vpop.f32.mrb[0].mxu0
        %v663 = vadd.f32 0.0, %v662
        %v664 = vpop.f32.mrb[0].mxu0
        %665 = vmatprep.mubr.f32.mxu0 %v571
        %666 = vmatmul.mubr.f32.gmra.mrb[0].mxu0 %v527
        %v667 = vpop.f32.mrb[0].mxu0
        %v668 = vadd.f32 0.0, %v667
        %v669 = vpop.f32.mrb[0].mxu0
        %670 = vmatprep.mubr.f32.mxu0 %v574
        %671 = vmatmul.mubr.f32.gmra.mrb[0].mxu0 %v529
        %v672 = vpop.f32.mrb[0].mxu0
        %v673 = vadd.f32 0.0, %v672
        %v674 = vpop.f32.mrb[0].mxu0
        %675 = vdwg.mxu0
        %v676 = vadd.f32 %v643, %v648
        %v677 = vadd.f32 %v676, %v653
        %v678 = vadd.f32 %v677, %v658
        %v679 = vadd.f32 %v678, %v663
        %v680 = vadd.f32 %v679, %v668
        %vm681 = vcmask 1040384
        %v682 = vsel %vm681, %v673, 0.0
        %v683 = vadd.f32 %v680, %v682
        %v684 = vrot.slane %v683, 4
        %v685 = vadd.f32 %v683, %v684
        %v686 = vrot.slane %v685, 2
        %v687 = vadd.f32 %v685, %v686
        %v688 = vrot.slane %v687, 1
        %v689 = vadd.f32 %v687, %v688
        %v690 = vrcp.pop 49.0
        %v691 = vmul.f32 %v689, %v690
        %v692 = vsub.f32 %v643, %v691
        %v693 = vsub.f32 %v648, %v691
        %v694 = vsub.f32 %v653, %v691
        %v695 = vsub.f32 %v658, %v691
        %v696 = vsub.f32 %v663, %v691
        %v697 = vsub.f32 %v668, %v691
        %v698 = vsub.f32 %v673, %v691
        %v699 = vmul.f32 %v692, %v692
        %v700 = vmul.f32 %v693, %v693
        %v701 = vmul.f32 %v694, %v694
        %v702 = vmul.f32 %v695, %v695
        %v703 = vmul.f32 %v696, %v696
        %v704 = vmul.f32 %v697, %v697
        %v705 = vmul.f32 %v698, %v698
        %v706 = vadd.f32 %v699, %v700
        %v707 = vadd.f32 %v706, %v701
        %v708 = vadd.f32 %v707, %v702
        %v709 = vadd.f32 %v708, %v703
        %v710 = vadd.f32 %v709, %v704
        %v711 = vsel %vm681, %v705, 0.0
        %v712 = vadd.f32 %v710, %v711
        %v713 = vrot.slane %v712, 4
        %v714 = vadd.f32 %v712, %v713
        %v715 = vrot.slane %v714, 2
        %v716 = vadd.f32 %v714, %v715
        %v717 = vrot.slane %v716, 1
        %v718 = vadd.f32 %v716, %v717
        %v719 = vmul.f32 %v718, %v690
        %v720 = vadd.f32 %v719, 0.001
        %v721 = vrsqrt.pop %v720
        %v722 = vmul.f32 %v692, %v721
        %v723 = vmul.f32 %v693, %v721
        %v724 = vmul.f32 %v694, %v721
        %v725 = vmul.f32 %v695, %v721
        %v726 = vmul.f32 %v696, %v721
        %v727 = vmul.f32 %v697, %v721
        %v728 = vmul.f32 %v698, %v721
        %v729 = vld [vmem:[%s507] sm:$0x1]
        %v731 = vlaneseq
        %v732 = vshrl.u32 %v731, 7
        %v733 = vsub.s32 0, %v732
        %v734 = vrot.slane %v729, %v733
        %v736 = vmul.f32 %v722, %v734
        %v737 = vmul.f32 %v723, %v734
        %v738 = vmul.f32 %v724, %v734
        %v739 = vmul.f32 %v725, %v734
        %v740 = vmul.f32 %v726, %v734
        %v741 = vmul.f32 %v727, %v734
        %v742 = vmul.f32 %v728, %v734
        %v743 = vld [vmem:[%s510] sm:$0x1]
        %v745 = vlaneseq
        %v746 = vshrl.u32 %v745, 7
        %v747 = vsub.s32 0, %v746
        %v748 = vrot.slane %v743, %v747
        %v750 = vadd.f32 %v736, %v748
        %v751 = vadd.f32 %v737, %v748
        %v752 = vadd.f32 %v738, %v748
        %v753 = vadd.f32 %v739, %v748
        %v754 = vadd.f32 %v740, %v748
        %v755 = vadd.f32 %v741, %v748
        %v756 = vadd.f32 %v742, %v748
        %v757 = vmax.f32 %v750, 0.0
        %v758 = vmax.f32 %v751, 0.0
        %v759 = vmax.f32 %v752, 0.0
        %v760 = vmax.f32 %v753, 0.0
        %v761 = vmax.f32 %v754, 0.0
        %v762 = vmax.f32 %v755, 0.0
        %v763 = vmax.f32 %v756, 0.0
        %764 = vst [vmem:[#allocation2] sm:$0xff] 0.0
        %765 = vst [vmem:[#allocation2 + $0x8] sm:$0x7] 0.0
        %766 = vst [vmem:[#allocation2 + $0x10] sm:$0xff] 0.0
        %767 = vst [vmem:[#allocation2 + $0x18] sm:$0x7] 0.0
        %768 = vst [vmem:[#allocation2 + $0x20] sm:$0xff] 0.0
        %769 = vst [vmem:[#allocation2 + $0x28] sm:$0x7] 0.0
        %770 = vst [vmem:[#allocation2 + $0x30] sm:$0xff] 0.0
        %771 = vst [vmem:[#allocation2 + $0x38] sm:$0x7] 0.0
        %772 = vst [vmem:[#allocation2 + $0x40] sm:$0xff] 0.0
        %773 = vst [vmem:[#allocation2 + $0x48] sm:$0x7] 0.0
        %774 = vst [vmem:[#allocation2 + $0x50] sm:$0xff] 0.0
        %775 = vst [vmem:[#allocation2 + $0x58] sm:$0x7] 0.0
        %776 = vst [vmem:[#allocation2 + $0x60] sm:$0xff] 0.0
        %777 = vst [vmem:[#allocation2 + $0x68] sm:$0x7] 0.0
        %778 = vst [vmem:[#allocation2 + $0x70] sm:$0xff] 0.0
        %779 = vst [vmem:[#allocation2 + $0x78] sm:$0x7] 0.0
        %780 = vst [vmem:[#allocation2 + $0x80] sm:$0xff] 0.0
        %781 = vst [vmem:[#allocation2 + $0x88] sm:$0x7] 0.0
        %782 = vst [vmem:[#allocation2 + $0x90] sm:$0xff] 0.0
        %783 = vst [vmem:[#allocation2 + $0x98] sm:$0x7] 0.0
        %784 = vst [vmem:[#allocation2 + $0xa0] sm:$0xff] 0.0
        %785 = vst [vmem:[#allocation2 + $0xa8] sm:$0x7] 0.0
        %s786 = scalar_lea.vmem [#allocation2], 32
        %787 = vst [vmem:[%s786 + $0x2] sm:$0x7f] %v757
        %s788 = scalar_lea.vmem [#allocation2], 48
        %789 = vst [vmem:[%s788 - $0x5] sm:$0x80] %v757
        %790 = vst [vmem:[%s788 + $0x3] sm:$0x3f] %v758
        %s791 = scalar_lea.vmem [#allocation2], 64
        %792 = vst [vmem:[%s791 - $0x4] sm:$0xc0] %v758
        %793 = vst [vmem:[%s791 + $0x4] sm:$0x1f] %v759
        %s794 = scalar_lea.vmem [#allocation2], 80
        %795 = vst [vmem:[%s794 - $0x3] sm:$0xe0] %v759
        %796 = vst [vmem:[%s794 + $0x5] sm:$0xf] %v760
        %s797 = scalar_lea.vmem [#allocation2], 96
        %798 = vst [vmem:[%s797 - $0x2] sm:$0xf0] %v760
        %799 = vst [vmem:[%s797 + $0x6] sm:$0x7] %v761
        %s800 = scalar_lea.vmem [#allocation2], 112
        %801 = vst [vmem:[%s800 - $0x1] sm:$0xf8] %v761
        %802 = vst [vmem:[%s800 + $0x7] sm:$0x3] %v762
        %s803 = scalar_lea.vmem [#allocation2], 128
        %804 = vst [vmem:[%s803] sm:$0xfc] %v762
        %805 = vst [vmem:[%s803 + $0x8] sm:$0x1] %v763
        %v806 = vld [vmem:[%s461] sm:$0xff]
        %v807 = vld [vmem:[%s461 + $0x8] sm:$0xff]
        %v808 = vld [vmem:[%s461 + $0x10] sm:$0xff]
        %v809 = vld [vmem:[%s461 + $0x18] sm:$0x1]
        %v810 = vld [vmem:[#allocation2] sm:$0x7f]
        %v811 = vld [vmem:[#allocation2 + $0x10] sm:$0x7f]
        %v812 = vld [vmem:[#allocation2 + $0x20] sm:$0x7f]
        %v813 = vld [vmem:[#allocation2 + $0x30] sm:$0x7f]
        %v814 = vld [vmem:[#allocation2 + $0x40] sm:$0x7f]
        %v815 = vld [vmem:[#allocation2 + $0x50] sm:$0x7f]
        %v816 = vld [vmem:[#allocation2 + $0x60] sm:$0x7f]
        %v817 = vld [vmem:[#allocation2 + $0x70] sm:$0x7f]
        %v818 = vld [vmem:[#allocation2 + $0x80] sm:$0x7f]
        %v819 = vld [vmem:[#allocation2 + $0x90] sm:$0x7f]
        %v820 = vld [vmem:[#allocation2 + $0xa0] sm:$0x7f]
        %v821 = vlaneseq
        %v822 = vshrl.u32 %v821, 7
        %v823 = vsub.s32 0, %v822
        %v824 = vrot.slane %v806, %v823
        %v825 = vmul.f32 %v810, %v824
        %v826 = vmul.f32 %v811, %v824
        %v827 = vmul.f32 %v812, %v824
        %v828 = vmul.f32 %v813, %v824
        %v829 = vmul.f32 %v814, %v824
        %v830 = vmul.f32 %v815, %v824
        %v831 = vmul.f32 %v816, %v824
        %v832 = vadd.f32 %v825, 0.0
        %v833 = vadd.f32 %v826, 0.0
        %v834 = vadd.f32 %v827, 0.0
        %v835 = vadd.f32 %v828, 0.0
        %v836 = vadd.f32 %v829, 0.0
        %v837 = vadd.f32 %v830, 0.0
        %v838 = vadd.f32 %v831, 0.0
        %v839 = vlaneseq
        %v840 = vshrl.u32 %v839, 7
        %v841 = vsub.s32 5, %v840
        %v842 = vrot.slane %v806, %v841
        %v843 = vmul.f32 %v811, %v842
        %v844 = vmul.f32 %v812, %v842
        %v845 = vmul.f32 %v813, %v842
        %v846 = vmul.f32 %v814, %v842
        %v847 = vmul.f32 %v815, %v842
        %v848 = vmul.f32 %v816, %v842
        %v849 = vmul.f32 %v817, %v842
        %v850 = vadd.f32 %v832, %v843
        %v851 = vadd.f32 %v833, %v844
        %v852 = vadd.f32 %v834, %v845
        %v853 = vadd.f32 %v835, %v846
        %v854 = vadd.f32 %v836, %v847
        %v855 = vadd.f32 %v837, %v848
        %v856 = vadd.f32 %v838, %v849
        %v857 = vlaneseq
        %v858 = vshrl.u32 %v857, 7
        %v859 = vsub.s32 2, %v858
        %v860 = vrot.slane %v807, %v859
        %v861 = vmul.f32 %v812, %v860
        %v862 = vmul.f32 %v813, %v860
        %v863 = vmul.f32 %v814, %v860
        %v864 = vmul.f32 %v815, %v860
        %v865 = vmul.f32 %v816, %v860
        %v866 = vmul.f32 %v817, %v860
        %v867 = vmul.f32 %v818, %v860
        %v868 = vadd.f32 %v850, %v861
        %v869 = vadd.f32 %v851, %v862
        %v870 = vadd.f32 %v852, %v863
        %v871 = vadd.f32 %v853, %v864
        %v872 = vadd.f32 %v854, %v865
        %v873 = vadd.f32 %v855, %v866
        %v874 = vadd.f32 %v856, %v867
        %v875 = vlaneseq
        %v876 = vshrl.u32 %v875, 7
        %v877 = vsub.s32 7, %v876
        %v878 = vrot.slane %v807, %v877
        %v879 = vmul.f32 %v813, %v878
        %v880 = vmul.f32 %v814, %v878
        %v881 = vmul.f32 %v815, %v878
        %v882 = vmul.f32 %v816, %v878
        %v883 = vmul.f32 %v817, %v878
        %v884 = vmul.f32 %v818, %v878
        %v885 = vmul.f32 %v819, %v878
        %v886 = vadd.f32 %v868, %v879
        %v887 = vadd.f32 %v869, %v880
        %v888 = vadd.f32 %v870, %v881
        %v889 = vadd.f32 %v871, %v882
        %v890 = vadd.f32 %v872, %v883
        %v891 = vadd.f32 %v873, %v884
        %v892 = vadd.f32 %v874, %v885
        %v893 = vlaneseq
        %v894 = vshrl.u32 %v893, 7
        %v895 = vsub.s32 4, %v894
        %v896 = vrot.slane %v808, %v895
        %v897 = vmul.f32 %v814, %v896
        %v898 = vmul.f32 %v815, %v896
        %v899 = vmul.f32 %v816, %v896
        %v900 = vmul.f32 %v817, %v896
        %v901 = vmul.f32 %v818, %v896
        %v902 = vmul.f32 %v819, %v896
        %v903 = vmul.f32 %v820, %v896
        %v904 = vadd.f32 %v886, %v897
        %v905 = vadd.f32 %v887, %v898
        %v906 = vadd.f32 %v888, %v899
        %v907 = vadd.f32 %v889, %v900
        %v908 = vadd.f32 %v890, %v901
        %v909 = vadd.f32 %v891, %v902
        %v910 = vadd.f32 %v892, %v903
        %v911 = vld [vmem:[#allocation2 + $0x1] sm:$0x7f]
        %v912 = vld [vmem:[#allocation2 + $0x11] sm:$0x7f]
        %v913 = vld [vmem:[#allocation2 + $0x21] sm:$0x7f]
        %v914 = vld [vmem:[#allocation2 + $0x31] sm:$0x7f]
        %v915 = vld [vmem:[#allocation2 + $0x41] sm:$0x7f]
        %v916 = vld [vmem:[#allocation2 + $0x51] sm:$0x7f]
        %v917 = vld [vmem:[#allocation2 + $0x61] sm:$0x7f]
        %v918 = vld [vmem:[#allocation2 + $0x71] sm:$0x7f]
        %v919 = vld [vmem:[#allocation2 + $0x81] sm:$0x7f]
        %v920 = vld [vmem:[#allocation2 + $0x91] sm:$0x7f]
        %v921 = vld [vmem:[#allocation2 + $0xa1] sm:$0x7f]
        %v922 = vlaneseq
        %v923 = vshrl.u32 %v922, 7
        %v924 = vsub.s32 1, %v923
        %v925 = vrot.slane %v806, %v924
        %v926 = vmul.f32 %v911, %v925
        %v927 = vmul.f32 %v912, %v925
        %v928 = vmul.f32 %v913, %v925
        %v929 = vmul.f32 %v914, %v925
        %v930 = vmul.f32 %v915, %v925
        %v931 = vmul.f32 %v916, %v925
        %v932 = vmul.f32 %v917, %v925
        %v933 = vadd.f32 %v904, %v926
        %v934 = vadd.f32 %v905, %v927
        %v935 = vadd.f32 %v906, %v928
        %v936 = vadd.f32 %v907, %v929
        %v937 = vadd.f32 %v908, %v930
        %v938 = vadd.f32 %v909, %v931
        %v939 = vadd.f32 %v910, %v932
        %v940 = vlaneseq
        %v941 = vshrl.u32 %v940, 7
        %v942 = vsub.s32 6, %v941
        %v943 = vrot.slane %v806, %v942
        %v944 = vmul.f32 %v912, %v943
        %v945 = vmul.f32 %v913, %v943
        %v946 = vmul.f32 %v914, %v943
        %v947 = vmul.f32 %v915, %v943
        %v948 = vmul.f32 %v916, %v943
        %v949 = vmul.f32 %v917, %v943
        %v950 = vmul.f32 %v918, %v943
        %v951 = vadd.f32 %v933, %v944
        %v952 = vadd.f32 %v934, %v945
        %v953 = vadd.f32 %v935, %v946
        %v954 = vadd.f32 %v936, %v947
        %v955 = vadd.f32 %v937, %v948
        %v956 = vadd.f32 %v938, %v949
        %v957 = vadd.f32 %v939, %v950
        %v958 = vlaneseq
        %v959 = vshrl.u32 %v958, 7
        %v960 = vsub.s32 3, %v959
        %v961 = vrot.slane %v807, %v960
        %v962 = vmul.f32 %v913, %v961
        %v963 = vmul.f32 %v914, %v961
        %v964 = vmul.f32 %v915, %v961
        %v965 = vmul.f32 %v916, %v961
        %v966 = vmul.f32 %v917, %v961
        %v967 = vmul.f32 %v918, %v961
        %v968 = vmul.f32 %v919, %v961
        %v969 = vadd.f32 %v951, %v962
        %v970 = vadd.f32 %v952, %v963
        %v971 = vadd.f32 %v953, %v964
        %v972 = vadd.f32 %v954, %v965
        %v973 = vadd.f32 %v955, %v966
        %v974 = vadd.f32 %v956, %v967
        %v975 = vadd.f32 %v957, %v968
        %v976 = vlaneseq
        %v977 = vshrl.u32 %v976, 7
        %v978 = vsub.s32 0, %v977
        %v979 = vrot.slane %v808, %v978
        %v980 = vmul.f32 %v914, %v979
        %v981 = vmul.f32 %v915, %v979
        %v982 = vmul.f32 %v916, %v979
        %v983 = vmul.f32 %v917, %v979
        %v984 = vmul.f32 %v918, %v979
        %v985 = vmul.f32 %v919, %v979
        %v986 = vmul.f32 %v920, %v979
        %v987 = vadd.f32 %v969, %v980
        %v988 = vadd.f32 %v970, %v981
        %v989 = vadd.f32 %v971, %v982
        %v990 = vadd.f32 %v972, %v983
        %v991 = vadd.f32 %v973, %v984
        %v992 = vadd.f32 %v974, %v985
        %v993 = vadd.f32 %v975, %v986
        %v994 = vlaneseq
        %v995 = vshrl.u32 %v994, 7
        %v996 = vsub.s32 5, %v995
        %v997 = vrot.slane %v808, %v996
        %v998 = vmul.f32 %v915, %v997
        %v999 = vmul.f32 %v916, %v997
        %v1000 = vmul.f32 %v917, %v997
        %v1001 = vmul.f32 %v918, %v997
        %v1002 = vmul.f32 %v919, %v997
        %v1003 = vmul.f32 %v920, %v997
        %v1004 = vmul.f32 %v921, %v997
        %v1005 = vadd.f32 %v987, %v998
        %v1006 = vadd.f32 %v988, %v999
        %v1007 = vadd.f32 %v989, %v1000
        %v1008 = vadd.f32 %v990, %v1001
        %v1009 = vadd.f32 %v991, %v1002
        %v1010 = vadd.f32 %v992, %v1003
        %v1011 = vadd.f32 %v993, %v1004
        %v1012 = vld [vmem:[#allocation2 + $0x2] sm:$0x7f]
        %v1013 = vld [vmem:[#allocation2 + $0x12] sm:$0x7f]
        %v1014 = vld [vmem:[#allocation2 + $0x22] sm:$0x7f]
        %v1015 = vld [vmem:[#allocation2 + $0x32] sm:$0x7f]
        %v1016 = vld [vmem:[#allocation2 + $0x42] sm:$0x7f]
        %v1017 = vld [vmem:[#allocation2 + $0x52] sm:$0x7f]
        %v1018 = vld [vmem:[#allocation2 + $0x62] sm:$0x7f]
        %v1019 = vld [vmem:[#allocation2 + $0x72] sm:$0x7f]
        %v1020 = vld [vmem:[#allocation2 + $0x82] sm:$0x7f]
        %v1021 = vld [vmem:[#allocation2 + $0x92] sm:$0x7f]
        %v1022 = vld [vmem:[#allocation2 + $0xa2] sm:$0x7f]
        %v1023 = vlaneseq
        %v1024 = vshrl.u32 %v1023, 7
        %v1025 = vsub.s32 2, %v1024
        %v1026 = vrot.slane %v806, %v1025
        %v1027 = vmul.f32 %v1012, %v1026
        %v1028 = vmul.f32 %v1013, %v1026
        %v1029 = vmul.f32 %v1014, %v1026
        %v1030 = vmul.f32 %v1015, %v1026
        %v1031 = vmul.f32 %v1016, %v1026
        %v1032 = vmul.f32 %v1017, %v1026
        %v1033 = vmul.f32 %v1018, %v1026
        %v1034 = vadd.f32 %v1005, %v1027
        %v1035 = vadd.f32 %v1006, %v1028
        %v1036 = vadd.f32 %v1007, %v1029
        %v1037 = vadd.f32 %v1008, %v1030
        %v1038 = vadd.f32 %v1009, %v1031
        %v1039 = vadd.f32 %v1010, %v1032
        %v1040 = vadd.f32 %v1011, %v1033
        %v1041 = vlaneseq
        %v1042 = vshrl.u32 %v1041, 7
        %v1043 = vsub.s32 7, %v1042
        %v1044 = vrot.slane %v806, %v1043
        %v1045 = vmul.f32 %v1013, %v1044
        %v1046 = vmul.f32 %v1014, %v1044
        %v1047 = vmul.f32 %v1015, %v1044
        %v1048 = vmul.f32 %v1016, %v1044
        %v1049 = vmul.f32 %v1017, %v1044
        %v1050 = vmul.f32 %v1018, %v1044
        %v1051 = vmul.f32 %v1019, %v1044
        %v1052 = vadd.f32 %v1034, %v1045
        %v1053 = vadd.f32 %v1035, %v1046
        %v1054 = vadd.f32 %v1036, %v1047
        %v1055 = vadd.f32 %v1037, %v1048
        %v1056 = vadd.f32 %v1038, %v1049
        %v1057 = vadd.f32 %v1039, %v1050
        %v1058 = vadd.f32 %v1040, %v1051
        %v1059 = vlaneseq
        %v1060 = vshrl.u32 %v1059, 7
        %v1061 = vsub.s32 4, %v1060
        %v1062 = vrot.slane %v807, %v1061
        %v1063 = vmul.f32 %v1014, %v1062
        %v1064 = vmul.f32 %v1015, %v1062
        %v1065 = vmul.f32 %v1016, %v1062
        %v1066 = vmul.f32 %v1017, %v1062
        %v1067 = vmul.f32 %v1018, %v1062
        %v1068 = vmul.f32 %v1019, %v1062
        %v1069 = vmul.f32 %v1020, %v1062
        %v1070 = vadd.f32 %v1052, %v1063
        %v1071 = vadd.f32 %v1053, %v1064
        %v1072 = vadd.f32 %v1054, %v1065
        %v1073 = vadd.f32 %v1055, %v1066
        %v1074 = vadd.f32 %v1056, %v1067
        %v1075 = vadd.f32 %v1057, %v1068
        %v1076 = vadd.f32 %v1058, %v1069
        %v1077 = vlaneseq
        %v1078 = vshrl.u32 %v1077, 7
        %v1079 = vsub.s32 1, %v1078
        %v1080 = vrot.slane %v808, %v1079
        %v1081 = vmul.f32 %v1015, %v1080
        %v1082 = vmul.f32 %v1016, %v1080
        %v1083 = vmul.f32 %v1017, %v1080
        %v1084 = vmul.f32 %v1018, %v1080
        %v1085 = vmul.f32 %v1019, %v1080
        %v1086 = vmul.f32 %v1020, %v1080
        %v1087 = vmul.f32 %v1021, %v1080
        %v1088 = vadd.f32 %v1070, %v1081
        %v1089 = vadd.f32 %v1071, %v1082
        %v1090 = vadd.f32 %v1072, %v1083
        %v1091 = vadd.f32 %v1073, %v1084
        %v1092 = vadd.f32 %v1074, %v1085
        %v1093 = vadd.f32 %v1075, %v1086
        %v1094 = vadd.f32 %v1076, %v1087
        %v1095 = vlaneseq
        %v1096 = vshrl.u32 %v1095, 7
        %v1097 = vsub.s32 6, %v1096
        %v1098 = vrot.slane %v808, %v1097
        %v1099 = vmul.f32 %v1016, %v1098
        %v1100 = vmul.f32 %v1017, %v1098
        %v1101 = vmul.f32 %v1018, %v1098
        %v1102 = vmul.f32 %v1019, %v1098
        %v1103 = vmul.f32 %v1020, %v1098
        %v1104 = vmul.f32 %v1021, %v1098
        %v1105 = vmul.f32 %v1022, %v1098
        %v1106 = vadd.f32 %v1088, %v1099
        %v1107 = vadd.f32 %v1089, %v1100
        %v1108 = vadd.f32 %v1090, %v1101
        %v1109 = vadd.f32 %v1091, %v1102
        %v1110 = vadd.f32 %v1092, %v1103
        %v1111 = vadd.f32 %v1093, %v1104
        %v1112 = vadd.f32 %v1094, %v1105
        %v1113 = vld [vmem:[#allocation2 + $0x3] sm:$0x7f]
        %v1114 = vld [vmem:[#allocation2 + $0x13] sm:$0x7f]
        %v1115 = vld [vmem:[#allocation2 + $0x23] sm:$0x7f]
        %v1116 = vld [vmem:[#allocation2 + $0x33] sm:$0x7f]
        %v1117 = vld [vmem:[#allocation2 + $0x43] sm:$0x7f]
        %v1118 = vld [vmem:[#allocation2 + $0x53] sm:$0x7f]
        %v1119 = vld [vmem:[#allocation2 + $0x63] sm:$0x7f]
        %v1120 = vld [vmem:[#allocation2 + $0x73] sm:$0x7f]
        %v1121 = vld [vmem:[#allocation2 + $0x83] sm:$0x7f]
        %v1122 = vld [vmem:[#allocation2 + $0x93] sm:$0x7f]
        %v1123 = vld [vmem:[#allocation2 + $0xa3] sm:$0x7f]
        %v1124 = vlaneseq
        %v1125 = vshrl.u32 %v1124, 7
        %v1126 = vsub.s32 3, %v1125
        %v1127 = vrot.slane %v806, %v1126
        %v1128 = vmul.f32 %v1113, %v1127
        %v1129 = vmul.f32 %v1114, %v1127
        %v1130 = vmul.f32 %v1115, %v1127
        %v1131 = vmul.f32 %v1116, %v1127
        %v1132 = vmul.f32 %v1117, %v1127
        %v1133 = vmul.f32 %v1118, %v1127
        %v1134 = vmul.f32 %v1119, %v1127
        %v1135 = vadd.f32 %v1106, %v1128
        %v1136 = vadd.f32 %v1107, %v1129
        %v1137 = vadd.f32 %v1108, %v1130
        %v1138 = vadd.f32 %v1109, %v1131
        %v1139 = vadd.f32 %v1110, %v1132
        %v1140 = vadd.f32 %v1111, %v1133
        %v1141 = vadd.f32 %v1112, %v1134
        %v1142 = vlaneseq
        %v1143 = vshrl.u32 %v1142, 7
        %v1144 = vsub.s32 0, %v1143
        %v1145 = vrot.slane %v807, %v1144
        %v1146 = vmul.f32 %v1114, %v1145
        %v1147 = vmul.f32 %v1115, %v1145
        %v1148 = vmul.f32 %v1116, %v1145
        %v1149 = vmul.f32 %v1117, %v1145
        %v1150 = vmul.f32 %v1118, %v1145
        %v1151 = vmul.f32 %v1119, %v1145
        %v1152 = vmul.f32 %v1120, %v1145
        %v1153 = vadd.f32 %v1135, %v1146
        %v1154 = vadd.f32 %v1136, %v1147
        %v1155 = vadd.f32 %v1137, %v1148
        %v1156 = vadd.f32 %v1138, %v1149
        %v1157 = vadd.f32 %v1139, %v1150
        %v1158 = vadd.f32 %v1140, %v1151
        %v1159 = vadd.f32 %v1141, %v1152
        %v1160 = vlaneseq
        %v1161 = vshrl.u32 %v1160, 7
        %v1162 = vsub.s32 5, %v1161
        %v1163 = vrot.slane %v807, %v1162
        %v1164 = vmul.f32 %v1115, %v1163
        %v1165 = vmul.f32 %v1116, %v1163
        %v1166 = vmul.f32 %v1117, %v1163
        %v1167 = vmul.f32 %v1118, %v1163
        %v1168 = vmul.f32 %v1119, %v1163
        %v1169 = vmul.f32 %v1120, %v1163
        %v1170 = vmul.f32 %v1121, %v1163
        %v1171 = vadd.f32 %v1153, %v1164
        %v1172 = vadd.f32 %v1154, %v1165
        %v1173 = vadd.f32 %v1155, %v1166
        %v1174 = vadd.f32 %v1156, %v1167
        %v1175 = vadd.f32 %v1157, %v1168
        %v1176 = vadd.f32 %v1158, %v1169
        %v1177 = vadd.f32 %v1159, %v1170
        %v1178 = vlaneseq
        %v1179 = vshrl.u32 %v1178, 7
        %v1180 = vsub.s32 2, %v1179
        %v1181 = vrot.slane %v808, %v1180
        %v1182 = vmul.f32 %v1116, %v1181
        %v1183 = vmul.f32 %v1117, %v1181
        %v1184 = vmul.f32 %v1118, %v1181
        %v1185 = vmul.f32 %v1119, %v1181
        %v1186 = vmul.f32 %v1120, %v1181
        %v1187 = vmul.f32 %v1121, %v1181
        %v1188 = vmul.f32 %v1122, %v1181
        %v1189 = vadd.f32 %v1171, %v1182
        %v1190 = vadd.f32 %v1172, %v1183
        %v1191 = vadd.f32 %v1173, %v1184
        %v1192 = vadd.f32 %v1174, %v1185
        %v1193 = vadd.f32 %v1175, %v1186
        %v1194 = vadd.f32 %v1176, %v1187
        %v1195 = vadd.f32 %v1177, %v1188
        %v1196 = vlaneseq
        %v1197 = vshrl.u32 %v1196, 7
        %v1198 = vsub.s32 7, %v1197
        %v1199 = vrot.slane %v808, %v1198
        %v1200 = vmul.f32 %v1117, %v1199
        %v1201 = vmul.f32 %v1118, %v1199
        %v1202 = vmul.f32 %v1119, %v1199
        %v1203 = vmul.f32 %v1120, %v1199
        %v1204 = vmul.f32 %v1121, %v1199
        %v1205 = vmul.f32 %v1122, %v1199
        %v1206 = vmul.f32 %v1123, %v1199
        %v1207 = vadd.f32 %v1189, %v1200
        %v1208 = vadd.f32 %v1190, %v1201
        %v1209 = vadd.f32 %v1191, %v1202
        %v1210 = vadd.f32 %v1192, %v1203
        %v1211 = vadd.f32 %v1193, %v1204
        %v1212 = vadd.f32 %v1194, %v1205
        %v1213 = vadd.f32 %v1195, %v1206
        %v1214 = vld [vmem:[#allocation2 + $0x4] sm:$0x7f]
        %v1215 = vld [vmem:[#allocation2 + $0x14] sm:$0x7f]
        %v1216 = vld [vmem:[#allocation2 + $0x24] sm:$0x7f]
        %v1217 = vld [vmem:[#allocation2 + $0x34] sm:$0x7f]
        %v1218 = vld [vmem:[#allocation2 + $0x44] sm:$0x7f]
        %v1219 = vld [vmem:[#allocation2 + $0x54] sm:$0x7f]
        %v1220 = vld [vmem:[#allocation2 + $0x64] sm:$0x7f]
        %v1221 = vld [vmem:[#allocation2 + $0x74] sm:$0x7f]
        %v1222 = vld [vmem:[#allocation2 + $0x84] sm:$0x7f]
        %v1223 = vld [vmem:[#allocation2 + $0x94] sm:$0x7f]
        %v1224 = vld [vmem:[#allocation2 + $0xa4] sm:$0x7f]
        %v1225 = vlaneseq
        %v1226 = vshrl.u32 %v1225, 7
        %v1227 = vsub.s32 4, %v1226
        %v1228 = vrot.slane %v806, %v1227
        %v1229 = vmul.f32 %v1214, %v1228
        %v1230 = vmul.f32 %v1215, %v1228
        %v1231 = vmul.f32 %v1216, %v1228
        %v1232 = vmul.f32 %v1217, %v1228
        %v1233 = vmul.f32 %v1218, %v1228
        %v1234 = vmul.f32 %v1219, %v1228
        %v1235 = vmul.f32 %v1220, %v1228
        %v1236 = vadd.f32 %v1207, %v1229
        %v1237 = vadd.f32 %v1208, %v1230
        %v1238 = vadd.f32 %v1209, %v1231
        %v1239 = vadd.f32 %v1210, %v1232
        %v1240 = vadd.f32 %v1211, %v1233
        %v1241 = vadd.f32 %v1212, %v1234
        %v1242 = vadd.f32 %v1213, %v1235
        %v1243 = vlaneseq
        %v1244 = vshrl.u32 %v1243, 7
        %v1245 = vsub.s32 1, %v1244
        %v1246 = vrot.slane %v807, %v1245
        %v1247 = vmul.f32 %v1215, %v1246
        %v1248 = vmul.f32 %v1216, %v1246
        %v1249 = vmul.f32 %v1217, %v1246
        %v1250 = vmul.f32 %v1218, %v1246
        %v1251 = vmul.f32 %v1219, %v1246
        %v1252 = vmul.f32 %v1220, %v1246
        %v1253 = vmul.f32 %v1221, %v1246
        %v1254 = vadd.f32 %v1236, %v1247
        %v1255 = vadd.f32 %v1237, %v1248
        %v1256 = vadd.f32 %v1238, %v1249
        %v1257 = vadd.f32 %v1239, %v1250
        %v1258 = vadd.f32 %v1240, %v1251
        %v1259 = vadd.f32 %v1241, %v1252
        %v1260 = vadd.f32 %v1242, %v1253
        %v1261 = vlaneseq
        %v1262 = vshrl.u32 %v1261, 7
        %v1263 = vsub.s32 6, %v1262
        %v1264 = vrot.slane %v807, %v1263
        %v1265 = vmul.f32 %v1216, %v1264
        %v1266 = vmul.f32 %v1217, %v1264
        %v1267 = vmul.f32 %v1218, %v1264
        %v1268 = vmul.f32 %v1219, %v1264
        %v1269 = vmul.f32 %v1220, %v1264
        %v1270 = vmul.f32 %v1221, %v1264
        %v1271 = vmul.f32 %v1222, %v1264
        %v1272 = vadd.f32 %v1254, %v1265
        %v1273 = vadd.f32 %v1255, %v1266
        %v1274 = vadd.f32 %v1256, %v1267
        %v1275 = vadd.f32 %v1257, %v1268
        %v1276 = vadd.f32 %v1258, %v1269
        %v1277 = vadd.f32 %v1259, %v1270
        %v1278 = vadd.f32 %v1260, %v1271
        %v1279 = vlaneseq
        %v1280 = vshrl.u32 %v1279, 7
        %v1281 = vsub.s32 3, %v1280
        %v1282 = vrot.slane %v808, %v1281
        %v1283 = vmul.f32 %v1217, %v1282
        %v1284 = vmul.f32 %v1218, %v1282
        %v1285 = vmul.f32 %v1219, %v1282
        %v1286 = vmul.f32 %v1220, %v1282
        %v1287 = vmul.f32 %v1221, %v1282
        %v1288 = vmul.f32 %v1222, %v1282
        %v1289 = vmul.f32 %v1223, %v1282
        %v1290 = vadd.f32 %v1272, %v1283
        %v1291 = vadd.f32 %v1273, %v1284
        %v1292 = vadd.f32 %v1274, %v1285
        %v1293 = vadd.f32 %v1275, %v1286
        %v1294 = vadd.f32 %v1276, %v1287
        %v1295 = vadd.f32 %v1277, %v1288
        %v1296 = vadd.f32 %v1278, %v1289
        %v1297 = vlaneseq
        %v1298 = vshrl.u32 %v1297, 7
        %v1299 = vsub.s32 0, %v1298
        %v1300 = vrot.slane %v809, %v1299
        %v1301 = vmul.f32 %v1218, %v1300
        %v1302 = vmul.f32 %v1219, %v1300
        %v1303 = vmul.f32 %v1220, %v1300
        %v1304 = vmul.f32 %v1221, %v1300
        %v1305 = vmul.f32 %v1222, %v1300
        %v1306 = vmul.f32 %v1223, %v1300
        %v1307 = vmul.f32 %v1224, %v1300
        %v1308 = vadd.f32 %v1290, %v1301
        %v1309 = vadd.f32 %v1291, %v1302
        %v1310 = vadd.f32 %v1292, %v1303
        %v1311 = vadd.f32 %v1293, %v1304
        %v1312 = vadd.f32 %v1294, %v1305
        %v1313 = vadd.f32 %v1295, %v1306
        %v1314 = vadd.f32 %v1296, %v1307
        %vm1315 = vcmask 1046528
        %v1316 = vsel %vm1315, %v1308, 0.0
        %v1317 = vsel %vm1315, %v1309, 0.0
        %v1318 = vadd.f32 %v1316, %v1317
        %v1319 = vsel %vm1315, %v1310, 0.0
        %v1320 = vadd.f32 %v1318, %v1319
        %v1321 = vsel %vm1315, %v1311, 0.0
        %v1322 = vadd.f32 %v1320, %v1321
        %v1323 = vsel %vm1315, %v1312, 0.0
        %v1324 = vadd.f32 %v1322, %v1323
        %v1325 = vsel %vm1315, %v1313, 0.0
        %v1326 = vadd.f32 %v1324, %v1325
        %v1327 = vsel %vm1315, %v1314, 0.0
        %v1328 = vadd.f32 %v1326, %v1327
        %v1329 = vrot.slane %v1328, 4
        %v1330 = vadd.f32 %v1328, %v1329
        %v1331 = vrot.slane %v1330, 2
        %v1332 = vadd.f32 %v1330, %v1331
        %v1333 = vrot.slane %v1332, 1
        %v1334 = vadd.f32 %v1332, %v1333
        %v1335 = vmul.f32 %v1334, %v690
        %v1336 = vsub.f32 %v1308, %v1335
        %v1337 = vsub.f32 %v1309, %v1335
        %v1338 = vsub.f32 %v1310, %v1335
        %v1339 = vsub.f32 %v1311, %v1335
        %v1340 = vsub.f32 %v1312, %v1335
        %v1341 = vsub.f32 %v1313, %v1335
        %v1342 = vsub.f32 %v1314, %v1335
        %v1343 = vmul.f32 %v1336, %v1336
        %v1344 = vmul.f32 %v1337, %v1337
        %v1345 = vmul.f32 %v1338, %v1338
        %v1346 = vmul.f32 %v1339, %v1339
        %v1347 = vmul.f32 %v1340, %v1340
        %v1348 = vmul.f32 %v1341, %v1341
        %v1349 = vmul.f32 %v1342, %v1342
        %v1350 = vsel %vm1315, %v1343, 0.0
        %v1351 = vsel %vm1315, %v1344, 0.0
        %v1352 = vadd.f32 %v1350, %v1351
        %v1353 = vsel %vm1315, %v1345, 0.0
        %v1354 = vadd.f32 %v1352, %v1353
        %v1355 = vsel %vm1315, %v1346, 0.0
        %v1356 = vadd.f32 %v1354, %v1355
        %v1357 = vsel %vm1315, %v1347, 0.0
        %v1358 = vadd.f32 %v1356, %v1357
        %v1359 = vsel %vm1315, %v1348, 0.0
        %v1360 = vadd.f32 %v1358, %v1359
        %v1361 = vsel %vm1315, %v1349, 0.0
        %v1362 = vadd.f32 %v1360, %v1361
        %v1363 = vrot.slane %v1362, 4
        %v1364 = vadd.f32 %v1362, %v1363
        %v1365 = vrot.slane %v1364, 2
        %v1366 = vadd.f32 %v1364, %v1365
        %v1367 = vrot.slane %v1366, 1
        %v1368 = vadd.f32 %v1366, %v1367
        %v1369 = vmul.f32 %v1368, %v690
        %v1370 = vld [vmem:[%s513] sm:$0x1]
        %v1371 = vld [vmem:[%s516] sm:$0x1]
        %v1372 = vadd.f32 %v1369, 0.001
        %v1373 = vrsqrt.pop %v1372
        %v1374 = vmul.f32 %v1336, %v1373
        %v1375 = vmul.f32 %v1337, %v1373
        %v1376 = vmul.f32 %v1338, %v1373
        %v1377 = vmul.f32 %v1339, %v1373
        %v1378 = vmul.f32 %v1340, %v1373
        %v1379 = vmul.f32 %v1341, %v1373
        %v1380 = vmul.f32 %v1342, %v1373
        %v1382 = vlaneseq
        %v1383 = vshrl.u32 %v1382, 7
        %v1384 = vsub.s32 0, %v1383
        %v1385 = vrot.slane %v1370, %v1384
        %v1387 = vmul.f32 %v1374, %v1385
        %v1388 = vmul.f32 %v1375, %v1385
        %v1389 = vmul.f32 %v1376, %v1385
        %v1390 = vmul.f32 %v1377, %v1385
        %v1391 = vmul.f32 %v1378, %v1385
        %v1392 = vmul.f32 %v1379, %v1385
        %v1393 = vmul.f32 %v1380, %v1385
        %v1395 = vlaneseq
        %v1396 = vshrl.u32 %v1395, 7
        %v1397 = vsub.s32 0, %v1396
        %v1398 = vrot.slane %v1371, %v1397
        %v1400 = vadd.f32 %v1387, %v1398
        %v1401 = vadd.f32 %v1388, %v1398
        %v1402 = vadd.f32 %v1389, %v1398
        %v1403 = vadd.f32 %v1390, %v1398
        %v1404 = vadd.f32 %v1391, %v1398
        %v1405 = vadd.f32 %v1392, %v1398
        %v1406 = vadd.f32 %v1393, %v1398
        %v1407 = vmax.f32 %v1400, 0.0
        %v1408 = vmax.f32 %v1401, 0.0
        %v1409 = vmax.f32 %v1402, 0.0
        %v1410 = vmax.f32 %v1403, 0.0
        %v1411 = vmax.f32 %v1404, 0.0
        %v1412 = vmax.f32 %v1405, 0.0
        %v1413 = vmax.f32 %v1406, 0.0
        %1414 = vst [vmem:[%s504] sm:$0x7f] %v1407
        %1415 = vst [vmem:[%s504 + $0x8] sm:$0x7f] %v1408
        %1416 = vst [vmem:[%s504 + $0x10] sm:$0x7f] %v1409
        %1417 = vst [vmem:[%s504 + $0x18] sm:$0x7f] %v1410
        %1418 = vst [vmem:[%s504 + $0x20] sm:$0x7f] %v1411
        %1419 = vst [vmem:[%s504 + $0x28] sm:$0x7f] %v1412
        %1420 = vst [vmem:[%s504 + $0x30] sm:$0x7f] %v1413
        %s1421 = sand.u32 %s203, 1
        %s1422 = sand.u32 %s203, 1
        %s1423 = smul.addr %s1422, 56
        %s1424 = scalar_lea.vmem [#allocation5], %s1423
        // Predicated region
        $region125: #{forward.1} parent=115 // pred_check
          %p1425 = pneg %p213
        $region126: #{forward.1} parent=115 // pred_check_branch
          %1427 = sbr.rel (%p1425) target = $region128
        $region127: #{forward.1} parent=115 // pred_region
          %s1428 = smul.addr %s18, 8
          %s1429 = scalar_lea.vmem %s7, %s1428
          // Predicated region
          $region129: #{forward.1} parent=127 // pred_check
            _
          $region130: #{forward.1} parent=127 // pred_check_branch
            %1431 = sbr.rel (0) target = $region132
          $region131: #{forward.1} parent=127 // pred_region
            // Predicated region
            $region133: #{forward.1} parent=131 // pred_check
              _
            $region134: #{forward.1} parent=131 // pred_check_branch
              %1433 = sbr.rel (0) target = $region136
            $region135: #{forward.1} parent=131 // pred_region
              // Predicated region
              $region148: #{forward.1} parent=135 // pred_check
                _
              $region149: #{forward.1} parent=135 // pred_check_branch
                %1460 = sbr.rel (0) target = $region151
              $region150: #{forward.1} parent=135 // pred_region
                loop: start=0, step=1, limit=1
                $region152: #{forward.1} parent=150 // loop_pre_header
                  _
                $region153: #{forward.1} parent=150 // loop_header
                  %s1462 = sphi 0, %s1466
                  %p1463 = scmp.ge.s32.totalorder %s1462, 1
                  %s1467 = sphi %s1424, %s1424
                  %s1468 = sphi %s1429, %s1429
                $region154: #{forward.1} parent=150 // loop_header_branch
                  %1465 = sbr.rel (%p1463) target = $region158
                $region155: #{forward.1} parent=150 // loop_body
                  %v1469 = vld [vmem:[%s1467] sm:$0xff]
                  %1470 = vst [vmem:[%s1468] sm:$0xff] %v1469
                  %v1471 = vld [vmem:[%s1467 + $0x8] sm:$0xff]
                  %1472 = vst [vmem:[%s1468 + $0x48] sm:$0xff] %v1471
                  %v1473 = vld [vmem:[%s1467 + $0x10] sm:$0xff]
                  %1474 = vst [vmem:[%s1468 + $0x90] sm:$0xff] %v1473
                  %v1475 = vld [vmem:[%s1467 + $0x18] sm:$0xff]
                  %1476 = vst [vmem:[%s1468 + $0xd8] sm:$0xff] %v1475
                  %v1477 = vld [vmem:[%s1467 + $0x20] sm:$0xff]
                  %1478 = vst [vmem:[%s1468 + $0x120] sm:$0xff] %v1477
                  %v1479 = vld [vmem:[%s1467 + $0x28] sm:$0xff]
                  %1480 = vst [vmem:[%s1468 + $0x168] sm:$0xff] %v1479
                  %v1481 = vld [vmem:[%s1467 + $0x30] sm:$0xff]
                  %1482 = vst [vmem:[%s1468 + $0x1b0] sm:$0xff] %v1481
                $region156: #{forward.1} parent=150 // loop_footer
                  %s1466 = sadd.s32 1, %s1462
                $region157: #{forward.1} parent=150 // loop_footer_branch
                  %1461 = sbr.rel target = $region153
                $region158: #{forward.1} parent=150 // loop_exit
                  _
              $region151: #{forward.1} parent=135 // pred_fallthru
                _
              // Predicated region
              $region159: #{forward.1} parent=135 // pred_check
                _
              $region160: #{forward.1} parent=135 // pred_check_branch
                %1484 = sbr.rel target = $region162
              $region161: #{forward.1} parent=135 // pred_region
                _
              $region162: #{forward.1} parent=135 // pred_fallthru
                _
            $region136: #{forward.1} parent=131 // pred_fallthru
              _
            // Predicated region
            $region137: #{forward.1} parent=131 // pred_check
              _
            $region138: #{forward.1} parent=131 // pred_check_branch
              %1435 = sbr.rel target = $region140
            $region139: #{forward.1} parent=131 // pred_region
              loop: start=0, step=1, limit=1
              $region141: #{forward.1} parent=139 // loop_pre_header
                _
              $region142: #{forward.1} parent=139 // loop_header
                %s1438 = sphi 0, %s1442
                %p1439 = scmp.ge.s32.totalorder %s1438, 1
                %s1443 = sphi %s1424, %s1424
                %s1444 = sphi %s1429, %s1429
              $region143: #{forward.1} parent=139 // loop_header_branch
                %1441 = sbr.rel (%p1439) target = $region147
              $region144: #{forward.1} parent=139 // loop_body
                %v1445 = vld [vmem:[%s1443] sm:$0xff]
                %1446 = vst [vmem:[%s1444] sm:$0xff] %v1445
                %v1447 = vld [vmem:[%s1443 + $0x8] sm:$0xff]
                %1448 = vst [vmem:[%s1444 + $0x48] sm:$0xff] %v1447
                %v1449 = vld [vmem:[%s1443 + $0x10] sm:$0xff]
                %1450 = vst [vmem:[%s1444 + $0x90] sm:$0xff] %v1449
                %v1451 = vld [vmem:[%s1443 + $0x18] sm:$0xff]
                %1452 = vst [vmem:[%s1444 + $0xd8] sm:$0xff] %v1451
                %v1453 = vld [vmem:[%s1443 + $0x20] sm:$0xff]
                %1454 = vst [vmem:[%s1444 + $0x120] sm:$0xff] %v1453
                %v1455 = vld [vmem:[%s1443 + $0x28] sm:$0xff]
                %1456 = vst [vmem:[%s1444 + $0x168] sm:$0xff] %v1455
                %v1457 = vld [vmem:[%s1443 + $0x30] sm:$0xff]
                %1458 = vst [vmem:[%s1444 + $0x1b0] sm:$0xff] %v1457
              $region145: #{forward.1} parent=139 // loop_footer
                %s1442 = sadd.s32 1, %s1438
              $region146: #{forward.1} parent=139 // loop_footer_branch
                %1437 = sbr.rel target = $region142
              $region147: #{forward.1} parent=139 // loop_exit
                _
            $region140: #{forward.1} parent=131 // pred_fallthru
              _
          $region132: #{forward.1} parent=127 // pred_fallthru
            _
          %1485 = vnop
        $region128: #{forward.1} parent=115 // pred_fallthru
          _
      $region116: #{forward.1} parent=5 // pred_fallthru
        _
      %p1486 = scmp.le.s32.totalorder 2, %s13
      // Predicated region
      $region163: #{forward.1} parent=5 // pred_check
        %p1487 = pneg %p1486
      $region164: #{forward.1} parent=5 // pred_check_branch
        %1489 = sbr.rel (%p1487) target = $region166
      $region165: #{forward.1} parent=5 // pred_region
        %s1490 = ssub.s32 %s13, 2
        // Predicated region
        $region167: #{forward.1} parent=165 // pred_check
          %p1491 = pneg %p219
        $region168: #{forward.1} parent=165 // pred_check_branch
          %1493 = sbr.rel (%p1491) target = $region170
        $region169: #{forward.1} parent=165 // pred_region
          %s1494 = sand.u32 %s204, 1
          %s1495 = sand.u32 %s204, 1
          %s1496 = smul.addr %s1495, 56
          %s1497 = scalar_lea.vmem [#allocation5], %s1496
        $region170: #{forward.1} parent=165 // pred_fallthru
          _
      $region166: #{forward.1} parent=5 // pred_fallthru
        _
    $region6: #{forward.1} parent=1 // loop_footer
      %s17 = sadd.s32 1, %s13
    $region7: #{forward.1} parent=1 // loop_footer_branch
      %12 = sbr.rel target = $region3
    $region8: #{forward.1} parent=1 // loop_exit
      _

</llo_original>
